<compile_context>
chip_gen: v7x
topology: tpu7x:2x2x1
jax: 0.10.0
libtpu: 0.0.40
codegen_flags: <defaults>
</compile_context>

<pallas_src>
import jax
import jax.numpy as jnp
from jax.experimental import pallas as pl
from jax.experimental.pallas import tpu as pltpu

N_EMBED = 128
NUM_HEADS = 4
HEAD_SIZE = N_EMBED // NUM_HEADS            # 32
SCALE = float(N_EMBED) ** -0.5              # C ** -0.5 with C = n_embed (as in the PyTorch code)
NEG_BIG = -1e30                             # finite "-inf" for the additive causal mask
_HP = jax.lax.Precision.HIGHEST             # only for trace-time folding + the reference


def mha_kernel(x_ref, wqkv_ref, wp_ref, b_ref, mask_ref, o_ref):
    """One grid step = BBLK batch elements; all heads processed inside the step."""
    bblk, T, C = x_ref.shape

    # Fused QKV projection: (BBLK*T, 128) @ (128, 384), bf16 operands, f32 accumulate.
    x2 = x_ref[...].reshape(bblk * T, C)                                    # bf16
    qkv = jnp.dot(x2, wqkv_ref[...], preferred_element_type=jnp.float32)    # (BBLK*T, 3C) f32

    q = qkv[:, :C].reshape(bblk, T, C)          # SCALE already folded into Wq
    k = qkv[:, C:2 * C].reshape(bblk, T, C)
    v = qkv[:, 2 * C:].reshape(bblk, T, C)      # wo already folded into Wv

    mask = mask_ref[...]                        # (T, T) additive: 0 / -1e30

    outs = []
    for h in range(NUM_HEADS):                  # 4 heads, unrolled (T<=128, small live set)
        sl = slice(h * HEAD_SIZE, (h + 1) * HEAD_SIZE)
        qh = q[:, :, sl].astype(jnp.bfloat16)
        kh = k[:, :, sl].astype(jnp.bfloat16)
        vh = v[:, :, sl].astype(jnp.bfloat16)

        # Batched q @ k^T over the BBLK axis (contract on hs, no explicit transpose).
        s = jnp.einsum("btd,bsd->bts", qh, kh,
                       preferred_element_type=jnp.float32)                  # (BBLK, T, T) f32
        s = s + mask[None, :, :]

        # Row-wise softmax, kept in f32 (VPU/EUP); reciprocal runs on the EUP slot.
        s = s - jnp.max(s, axis=-1, keepdims=True)
        p = jnp.exp(s)
        p = p * pl.reciprocal(jnp.sum(p, axis=-1, keepdims=True), approx=True)

        outs.append(jnp.einsum("bts,bsd->btd", p.astype(jnp.bfloat16), vh,
                               preferred_element_type=jnp.float32))         # (BBLK, T, hs)

    # Lane-dense (BBLK*T, C) slab -> single (C, C) output projection + folded bias.
    out_cat = jnp.concatenate(outs, axis=-1).reshape(bblk * T, C)
    out2 = jnp.dot(out_cat.astype(jnp.bfloat16), wp_ref[...],
                   preferred_element_type=jnp.float32) + b_ref[...]
    o_ref[...] = out2.reshape(bblk, T, C)


def _pick_bblk(B, T):
    """Largest divisor of B with BBLK*T <= 512 rows, keeping >= 2 grid steps when B > 1."""
    best = 1
    for d in range(1, B + 1):
        if B % d:
            continue
        if d * T <= 512 and (B // d >= 2 or B == 1):
            best = d
    return best


def multi_head_attention(x, params, *, bblk=None):
    B, T, C = x.shape
    assert C == N_EMBED
    if bblk is None:
        bblk = _pick_bblk(B, T)
    assert B % bblk == 0

    wq, wk, wv = params["wq"], params["wk"], params["wv"]   # (H, C, hs)
    wo, bo = params["wo"], params["bo"]                     # (H, hs, hs), (H, 1, hs)
    wp, bp = params["wp"], params["bp"]                     # (H, hs, C),  (1, C)

    # ---- trace-time weight folding (f32, highest precision, done once) ----
    wq_cat = jnp.transpose(wq, (1, 0, 2)).reshape(C, C) * SCALE             # scale folded in
    wk_cat = jnp.transpose(wk, (1, 0, 2)).reshape(C, C)
    wv_fold = jnp.einsum("hcs,hst->hct", wv, wo, precision=_HP)             # wv[h] @ wo[h]
    wv_cat = jnp.transpose(wv_fold, (1, 0, 2)).reshape(C, C)
    wqkv = jnp.concatenate([wq_cat, wk_cat, wv_cat], axis=1)                # (C, 3C)
    wp_cat = wp.reshape(C, C)                                               # (H*hs, C)
    b_eff = jnp.einsum("hos,hsc->oc", bo, wp, precision=_HP) + bp           # (1, C)

    # Additive causal mask built once (0 on/below diagonal, -1e30 above).
    row = jax.lax.broadcasted_iota(jnp.int32, (T, T), 0)
    col = jax.lax.broadcasted_iota(jnp.int32, (T, T), 1)
    mask = jnp.where(row >= col, 0.0, NEG_BIG).astype(jnp.float32)

    # bf16 operands for the MXU (f32 accumulation inside the kernel); bias/mask stay f32.
    x_bf = x.astype(jnp.bfloat16)
    wqkv = wqkv.astype(jnp.bfloat16)
    wp_cat = wp_cat.astype(jnp.bfloat16)
    b_eff = b_eff.astype(jnp.float32)

    kernel = pl.pallas_call(
        mha_kernel,
        out_shape=jax.ShapeDtypeStruct((B, T, C), jnp.float32),
        grid_spec=pltpu.PrefetchScalarGridSpec(
            num_scalar_prefetch=0,
            grid=(B // bblk,),
            in_specs=[
                pl.BlockSpec((bblk, T, C), lambda b: (b, 0, 0)),   # x tile (BBLK sequences)
                pl.BlockSpec((C, 3 * C), lambda b: (0, 0)),        # fused Wqkv (resident)
                pl.BlockSpec((C, C), lambda b: (0, 0)),            # output projection
                pl.BlockSpec((1, C), lambda b: (0, 0)),            # folded effective bias
                pl.BlockSpec((T, T), lambda b: (0, 0)),            # additive causal mask
            ],
            out_specs=pl.BlockSpec((bblk, T, C), lambda b: (b, 0, 0)),
        ),
        compiler_params=pltpu.CompilerParams(
            dimension_semantics=("parallel",)),                    # batch blocks split across TCs
    )
    # NOTE: the weight/bias/mask inputs have constant index_maps; on VMEM-tight parts
    # (v7x, 64 MiB) they could additionally use pipeline_mode=pl.Buffered(1) to drop the
    # second buffer — omitted here since the resident footprint is only ~0.2 MiB.
    return kernel(x_bf, wqkv, wp_cat, b_eff, mask)


def reference(x, params):
    """Pure-JAX mirror of the PyTorch forward (eval mode), at HIGHEST matmul precision."""
    B, T, C = x.shape
    tril = jnp.tril(jnp.ones((T, T)))
    heads = []
    for h in range(NUM_HEADS):
        q = jnp.einsum("btc,cd->btd", x, params["wq"][h], precision=_HP)
        k = jnp.einsum("btc,cd->btd", x, params["wk"][h], precision=_HP)
        v = jnp.einsum("btc,cd->btd", x, params["wv"][h], precision=_HP)
        wei = jnp.einsum("btd,bsd->bts", q, k, precision=_HP) * SCALE
        wei = jnp.where(tril == 0, -jnp.inf, wei)
        wei = jax.nn.softmax(wei, axis=-1)
        out = jnp.einsum("bts,bsd->btd", wei, v, precision=_HP)
        out = jnp.einsum("btd,de->bte", out, params["wo"][h], precision=_HP) + params["bo"][h, 0]
        heads.append(out)
    cat = jnp.concatenate(heads, axis=-1)
    wp_full = params["wp"].reshape(N_EMBED, N_EMBED)
    return jnp.einsum("btc,cd->btd", cat, wp_full, precision=_HP) + params["bp"][0]


def init_params(key):
    ks = jax.random.split(key, 7)
    s = 0.02
    return {
        "wq": jax.random.normal(ks[0], (NUM_HEADS, N_EMBED, HEAD_SIZE), jnp.float32) * s,
        "wk": jax.random.normal(ks[1], (NUM_HEADS, N_EMBED, HEAD_SIZE), jnp.float32) * s,
        "wv": jax.random.normal(ks[2], (NUM_HEADS, N_EMBED, HEAD_SIZE), jnp.float32) * s,
        "wo": jax.random.normal(ks[3], (NUM_HEADS, HEAD_SIZE, HEAD_SIZE), jnp.float32) * s,
        "bo": jax.random.normal(ks[4], (NUM_HEADS, 1, HEAD_SIZE), jnp.float32) * s,
        # final proj weight stored (in, out), pre-split by head along the input dim
        "wp": jax.random.normal(ks[5], (NUM_HEADS, HEAD_SIZE, N_EMBED), jnp.float32) * s,
        "bp": jax.random.normal(ks[6], (1, N_EMBED), jnp.float32) * s,
    }


if __name__ == "__main__":
    key = jax.random.PRNGKey(0)
    k_x, k_p = jax.random.split(key)

    B, T = 8, 16                                   # T <= block_size (128); BBLK=4 -> grid=(2,)
    x = jax.random.normal(k_x, (B, T, N_EMBED), jnp.float32)
    params = init_params(k_p)

    out = jax.block_until_ready(multi_head_attention(x, params))
    ref = reference(x, params)

    assert out.shape == (B, T, N_EMBED)
    # bf16 MXU operands + folded-weight ordering + approx EUP reciprocal => bf16-level tolerance.
    max_err = float(jnp.max(jnp.abs(out - ref)))
    assert jnp.allclose(out, ref, rtol=2e-2, atol=2e-3), (
        f"mismatch vs pure-JAX reference: max abs err = {max_err}")

    print("KERNEL_OK")
</pallas_src>

<mosaic_0001>
module attributes {stable_mosaic.version = 11 : i64} {
  func.func @mha_kernel(%arg0: i32, %arg1: memref<4x16x128xbf16, #tpu.memory_space<vmem>>, %arg2: memref<128x384xbf16, #tpu.memory_space<vmem>>, %arg3: memref<128x128xbf16, #tpu.memory_space<vmem>>, %arg4: memref<1x128xf32, #tpu.memory_space<vmem>>, %arg5: memref<16x16xf32, #tpu.memory_space<vmem>>, %arg6: memref<4x16x128xf32, #tpu.memory_space<vmem>>) attributes {dimension_semantics = [#tpu.dimension_semantics<parallel>], iteration_bounds = array<i64: 2>, scalar_prefetch = 0 : i64, scratch_operands = 0 : i64, tpu.core_type = #tpu.core_type<tc>, window_params = [{transform_indices = @transform_0, window_bounds = array<i64: 4, 16, 128>}, {pipeline_mode = #tpu.pipeline_mode<synchronous>, transform_indices = @transform_1, window_bounds = array<i64: 128, 384>}, {pipeline_mode = #tpu.pipeline_mode<synchronous>, transform_indices = @transform_2, window_bounds = array<i64: 128, 128>}, {pipeline_mode = #tpu.pipeline_mode<synchronous>, transform_indices = @transform_3, window_bounds = array<i64: 1, 128>}, {pipeline_mode = #tpu.pipeline_mode<synchronous>, transform_indices = @transform_4, window_bounds = array<i64: 16, 16>}, {transform_indices = @transform_5, window_bounds = array<i64: 4, 16, 128>}]} {
    %c0 = arith.constant 0 : index
    %c0_0 = arith.constant 0 : index
    %c0_1 = arith.constant 0 : index
    %0 = vector.load %arg1[%c0, %c0_0, %c0_1] : memref<4x16x128xbf16, #tpu.memory_space<vmem>>, vector<4x16x128xbf16>
    %1 = vector.shape_cast %0 : vector<4x16x128xbf16> to vector<64x128xbf16>
    %c0_2 = arith.constant 0 : index
    %c0_3 = arith.constant 0 : index
    %2 = vector.load %arg2[%c0_2, %c0_3] : memref<128x384xbf16, #tpu.memory_space<vmem>>, vector<128x384xbf16>
    %cst = arith.constant dense<0.000000e+00> : vector<64x384xf32>
    %3 = tpu.matmul %1, %2, %cst {dimension_numbers = #tpu.dot_dimension_numbers<[1], [0], [0], [1], [0, 0, 1, 1], [], []>} : vector<64x128xbf16>, vector<128x384xbf16>, vector<64x384xf32> -> vector<64x384xf32>
    %4 = vector.extract_strided_slice %3 {offsets = [0, 0], sizes = [64, 128], strides = [1, 1]} : vector<64x384xf32> to vector<64x128xf32>
    %5 = vector.shape_cast %4 : vector<64x128xf32> to vector<4x16x128xf32>
    %6 = vector.extract_strided_slice %3 {offsets = [0, 128], sizes = [64, 128], strides = [1, 1]} : vector<64x384xf32> to vector<64x128xf32>
    %7 = vector.shape_cast %6 : vector<64x128xf32> to vector<4x16x128xf32>
    %8 = vector.extract_strided_slice %3 {offsets = [0, 256], sizes = [64, 128], strides = [1, 1]} : vector<64x384xf32> to vector<64x128xf32>
    %9 = vector.shape_cast %8 : vector<64x128xf32> to vector<4x16x128xf32>
    %c0_4 = arith.constant 0 : index
    %c0_5 = arith.constant 0 : index
    %10 = vector.load %arg5[%c0_4, %c0_5] : memref<16x16xf32, #tpu.memory_space<vmem>>, vector<16x16xf32>
    %11 = vector.extract_strided_slice %5 {offsets = [0, 0, 0], sizes = [4, 16, 32], strides = [1, 1, 1]} : vector<4x16x128xf32> to vector<4x16x32xf32>
    %12 = arith.truncf %11 : vector<4x16x32xf32> to vector<4x16x32xbf16>
    %13 = vector.extract_strided_slice %7 {offsets = [0, 0, 0], sizes = [4, 16, 32], strides = [1, 1, 1]} : vector<4x16x128xf32> to vector<4x16x32xf32>
    %14 = arith.truncf %13 : vector<4x16x32xf32> to vector<4x16x32xbf16>
    %15 = vector.extract_strided_slice %9 {offsets = [0, 0, 0], sizes = [4, 16, 32], strides = [1, 1, 1]} : vector<4x16x128xf32> to vector<4x16x32xf32>
    %16 = arith.truncf %15 : vector<4x16x32xf32> to vector<4x16x32xbf16>
    "tpu.trace_start"() <{level = 10 : i32, message = "btd,bsd->bts"}> : () -> ()
    %cst_6 = arith.constant dense<0.000000e+00> : vector<4x16x16xf32>
    %17 = tpu.matmul %12, %14, %cst_6 {dimension_numbers = #tpu.dot_dimension_numbers<[2], [2], [1], [1], [0, 0, 0, 1, 1, 1], [0], [0]>} : vector<4x16x32xbf16>, vector<4x16x32xbf16>, vector<4x16x16xf32> -> vector<4x16x16xf32>
    "tpu.trace_stop"() : () -> ()
    %18 = vector.shape_cast %10 : vector<16x16xf32> to vector<1x16x16xf32>
    %19 = vector.broadcast %18 : vector<1x16x16xf32> to vector<4x16x16xf32>
    %20 = arith.addf %17, %19 : vector<4x16x16xf32>
    %cst_7 = arith.constant dense<0xFF800000> : vector<4x16xf32>
    %21 = vector.multi_reduction <maximumf>, %20, %cst_7 [2] : vector<4x16x16xf32> to vector<4x16xf32>
    %22 = vector.shape_cast %21 : vector<4x16xf32> to vector<4x16x1xf32>
    %23 = vector.broadcast %22 : vector<4x16x1xf32> to vector<4x16x16xf32>
    %24 = arith.subf %20, %23 : vector<4x16x16xf32>
    %25 = math.exp %24 : vector<4x16x16xf32>
    %cst_8 = arith.constant dense<0.000000e+00> : vector<4x16xf32>
    %26 = vector.multi_reduction <add>, %25, %cst_8 [2] : vector<4x16x16xf32> to vector<4x16xf32>
    %27 = vector.shape_cast %26 : vector<4x16xf32> to vector<4x16x1xf32>
    %28 = tpu.reciprocal %27 {approx = true} : vector<4x16x1xf32> -> vector<4x16x1xf32>
    %29 = vector.broadcast %28 : vector<4x16x1xf32> to vector<4x16x16xf32>
    %30 = arith.mulf %25, %29 : vector<4x16x16xf32>
    %31 = arith.truncf %30 : vector<4x16x16xf32> to vector<4x16x16xbf16>
    "tpu.trace_start"() <{level = 10 : i32, message = "bts,bsd->btd"}> : () -> ()
    %cst_9 = arith.constant dense<0.000000e+00> : vector<4x16x32xf32>
    %32 = tpu.matmul %31, %16, %cst_9 {dimension_numbers = #tpu.dot_dimension_numbers<[2], [1], [1], [2], [0, 0, 0, 1, 1, 2], [0], [0]>} : vector<4x16x16xbf16>, vector<4x16x32xbf16>, vector<4x16x32xf32> -> vector<4x16x32xf32>
    "tpu.trace_stop"() : () -> ()
    %33 = vector.extract_strided_slice %5 {offsets = [0, 0, 32], sizes = [4, 16, 32], strides = [1, 1, 1]} : vector<4x16x128xf32> to vector<4x16x32xf32>
    %34 = arith.truncf %33 : vector<4x16x32xf32> to vector<4x16x32xbf16>
    %35 = vector.extract_strided_slice %7 {offsets = [0, 0, 32], sizes = [4, 16, 32], strides = [1, 1, 1]} : vector<4x16x128xf32> to vector<4x16x32xf32>
    %36 = arith.truncf %35 : vector<4x16x32xf32> to vector<4x16x32xbf16>
    %37 = vector.extract_strided_slice %9 {offsets = [0, 0, 32], sizes = [4, 16, 32], strides = [1, 1, 1]} : vector<4x16x128xf32> to vector<4x16x32xf32>
    %38 = arith.truncf %37 : vector<4x16x32xf32> to vector<4x16x32xbf16>
    "tpu.trace_start"() <{level = 10 : i32, message = "btd,bsd->bts"}> : () -> ()
    %cst_10 = arith.constant dense<0.000000e+00> : vector<4x16x16xf32>
    %39 = tpu.matmul %34, %36, %cst_10 {dimension_numbers = #tpu.dot_dimension_numbers<[2], [2], [1], [1], [0, 0, 0, 1, 1, 1], [0], [0]>} : vector<4x16x32xbf16>, vector<4x16x32xbf16>, vector<4x16x16xf32> -> vector<4x16x16xf32>
    "tpu.trace_stop"() : () -> ()
    %40 = vector.shape_cast %10 : vector<16x16xf32> to vector<1x16x16xf32>
    %41 = vector.broadcast %40 : vector<1x16x16xf32> to vector<4x16x16xf32>
    %42 = arith.addf %39, %41 : vector<4x16x16xf32>
    %cst_11 = arith.constant dense<0xFF800000> : vector<4x16xf32>
    %43 = vector.multi_reduction <maximumf>, %42, %cst_11 [2] : vector<4x16x16xf32> to vector<4x16xf32>
    %44 = vector.shape_cast %43 : vector<4x16xf32> to vector<4x16x1xf32>
    %45 = vector.broadcast %44 : vector<4x16x1xf32> to vector<4x16x16xf32>
    %46 = arith.subf %42, %45 : vector<4x16x16xf32>
    %47 = math.exp %46 : vector<4x16x16xf32>
    %cst_12 = arith.constant dense<0.000000e+00> : vector<4x16xf32>
    %48 = vector.multi_reduction <add>, %47, %cst_12 [2] : vector<4x16x16xf32> to vector<4x16xf32>
    %49 = vector.shape_cast %48 : vector<4x16xf32> to vector<4x16x1xf32>
    %50 = tpu.reciprocal %49 {approx = true} : vector<4x16x1xf32> -> vector<4x16x1xf32>
    %51 = vector.broadcast %50 : vector<4x16x1xf32> to vector<4x16x16xf32>
    %52 = arith.mulf %47, %51 : vector<4x16x16xf32>
    %53 = arith.truncf %52 : vector<4x16x16xf32> to vector<4x16x16xbf16>
    "tpu.trace_start"() <{level = 10 : i32, message = "bts,bsd->btd"}> : () -> ()
    %cst_13 = arith.constant dense<0.000000e+00> : vector<4x16x32xf32>
    %54 = tpu.matmul %53, %38, %cst_13 {dimension_numbers = #tpu.dot_dimension_numbers<[2], [1], [1], [2], [0, 0, 0, 1, 1, 2], [0], [0]>} : vector<4x16x16xbf16>, vector<4x16x32xbf16>, vector<4x16x32xf32> -> vector<4x16x32xf32>
    "tpu.trace_stop"() : () -> ()
    %55 = vector.extract_strided_slice %5 {offsets = [0, 0, 64], sizes = [4, 16, 32], strides = [1, 1, 1]} : vector<4x16x128xf32> to vector<4x16x32xf32>
    %56 = arith.truncf %55 : vector<4x16x32xf32> to vector<4x16x32xbf16>
    %57 = vector.extract_strided_slice %7 {offsets = [0, 0, 64], sizes = [4, 16, 32], strides = [1, 1, 1]} : vector<4x16x128xf32> to vector<4x16x32xf32>
    %58 = arith.truncf %57 : vector<4x16x32xf32> to vector<4x16x32xbf16>
    %59 = vector.extract_strided_slice %9 {offsets = [0, 0, 64], sizes = [4, 16, 32], strides = [1, 1, 1]} : vector<4x16x128xf32> to vector<4x16x32xf32>
    %60 = arith.truncf %59 : vector<4x16x32xf32> to vector<4x16x32xbf16>
    "tpu.trace_start"() <{level = 10 : i32, message = "btd,bsd->bts"}> : () -> ()
    %cst_14 = arith.constant dense<0.000000e+00> : vector<4x16x16xf32>
    %61 = tpu.matmul %56, %58, %cst_14 {dimension_numbers = #tpu.dot_dimension_numbers<[2], [2], [1], [1], [0, 0, 0, 1, 1, 1], [0], [0]>} : vector<4x16x32xbf16>, vector<4x16x32xbf16>, vector<4x16x16xf32> -> vector<4x16x16xf32>
    "tpu.trace_stop"() : () -> ()
    %62 = vector.shape_cast %10 : vector<16x16xf32> to vector<1x16x16xf32>
    %63 = vector.broadcast %62 : vector<1x16x16xf32> to vector<4x16x16xf32>
    %64 = arith.addf %61, %63 : vector<4x16x16xf32>
    %cst_15 = arith.constant dense<0xFF800000> : vector<4x16xf32>
    %65 = vector.multi_reduction <maximumf>, %64, %cst_15 [2] : vector<4x16x16xf32> to vector<4x16xf32>
    %66 = vector.shape_cast %65 : vector<4x16xf32> to vector<4x16x1xf32>
    %67 = vector.broadcast %66 : vector<4x16x1xf32> to vector<4x16x16xf32>
    %68 = arith.subf %64, %67 : vector<4x16x16xf32>
    %69 = math.exp %68 : vector<4x16x16xf32>
    %cst_16 = arith.constant dense<0.000000e+00> : vector<4x16xf32>
    %70 = vector.multi_reduction <add>, %69, %cst_16 [2] : vector<4x16x16xf32> to vector<4x16xf32>
    %71 = vector.shape_cast %70 : vector<4x16xf32> to vector<4x16x1xf32>
    %72 = tpu.reciprocal %71 {approx = true} : vector<4x16x1xf32> -> vector<4x16x1xf32>
    %73 = vector.broadcast %72 : vector<4x16x1xf32> to vector<4x16x16xf32>
    %74 = arith.mulf %69, %73 : vector<4x16x16xf32>
    %75 = arith.truncf %74 : vector<4x16x16xf32> to vector<4x16x16xbf16>
    "tpu.trace_start"() <{level = 10 : i32, message = "bts,bsd->btd"}> : () -> ()
    %cst_17 = arith.constant dense<0.000000e+00> : vector<4x16x32xf32>
    %76 = tpu.matmul %75, %60, %cst_17 {dimension_numbers = #tpu.dot_dimension_numbers<[2], [1], [1], [2], [0, 0, 0, 1, 1, 2], [0], [0]>} : vector<4x16x16xbf16>, vector<4x16x32xbf16>, vector<4x16x32xf32> -> vector<4x16x32xf32>
    "tpu.trace_stop"() : () -> ()
    %77 = vector.extract_strided_slice %5 {offsets = [0, 0, 96], sizes = [4, 16, 32], strides = [1, 1, 1]} : vector<4x16x128xf32> to vector<4x16x32xf32>
    %78 = arith.truncf %77 : vector<4x16x32xf32> to vector<4x16x32xbf16>
    %79 = vector.extract_strided_slice %7 {offsets = [0, 0, 96], sizes = [4, 16, 32], strides = [1, 1, 1]} : vector<4x16x128xf32> to vector<4x16x32xf32>
    %80 = arith.truncf %79 : vector<4x16x32xf32> to vector<4x16x32xbf16>
    %81 = vector.extract_strided_slice %9 {offsets = [0, 0, 96], sizes = [4, 16, 32], strides = [1, 1, 1]} : vector<4x16x128xf32> to vector<4x16x32xf32>
    %82 = arith.truncf %81 : vector<4x16x32xf32> to vector<4x16x32xbf16>
    "tpu.trace_start"() <{level = 10 : i32, message = "btd,bsd->bts"}> : () -> ()
    %cst_18 = arith.constant dense<0.000000e+00> : vector<4x16x16xf32>
    %83 = tpu.matmul %78, %80, %cst_18 {dimension_numbers = #tpu.dot_dimension_numbers<[2], [2], [1], [1], [0, 0, 0, 1, 1, 1], [0], [0]>} : vector<4x16x32xbf16>, vector<4x16x32xbf16>, vector<4x16x16xf32> -> vector<4x16x16xf32>
    "tpu.trace_stop"() : () -> ()
    %84 = vector.shape_cast %10 : vector<16x16xf32> to vector<1x16x16xf32>
    %85 = vector.broadcast %84 : vector<1x16x16xf32> to vector<4x16x16xf32>
    %86 = arith.addf %83, %85 : vector<4x16x16xf32>
    %cst_19 = arith.constant dense<0xFF800000> : vector<4x16xf32>
    %87 = vector.multi_reduction <maximumf>, %86, %cst_19 [2] : vector<4x16x16xf32> to vector<4x16xf32>
    %88 = vector.shape_cast %87 : vector<4x16xf32> to vector<4x16x1xf32>
    %89 = vector.broadcast %88 : vector<4x16x1xf32> to vector<4x16x16xf32>
    %90 = arith.subf %86, %89 : vector<4x16x16xf32>
    %91 = math.exp %90 : vector<4x16x16xf32>
    %cst_20 = arith.constant dense<0.000000e+00> : vector<4x16xf32>
    %92 = vector.multi_reduction <add>, %91, %cst_20 [2] : vector<4x16x16xf32> to vector<4x16xf32>
    %93 = vector.shape_cast %92 : vector<4x16xf32> to vector<4x16x1xf32>
    %94 = tpu.reciprocal %93 {approx = true} : vector<4x16x1xf32> -> vector<4x16x1xf32>
    %95 = vector.broadcast %94 : vector<4x16x1xf32> to vector<4x16x16xf32>
    %96 = arith.mulf %91, %95 : vector<4x16x16xf32>
    %97 = arith.truncf %96 : vector<4x16x16xf32> to vector<4x16x16xbf16>
    "tpu.trace_start"() <{level = 10 : i32, message = "bts,bsd->btd"}> : () -> ()
    %cst_21 = arith.constant dense<0.000000e+00> : vector<4x16x32xf32>
    %98 = tpu.matmul %97, %82, %cst_21 {dimension_numbers = #tpu.dot_dimension_numbers<[2], [1], [1], [2], [0, 0, 0, 1, 1, 2], [0], [0]>} : vector<4x16x16xbf16>, vector<4x16x32xbf16>, vector<4x16x32xf32> -> vector<4x16x32xf32>
    "tpu.trace_stop"() : () -> ()
    %99 = tpu.concatenate %32, %54, %76, %98 in 2 : vector<4x16x32xf32>, vector<4x16x32xf32>, vector<4x16x32xf32>, vector<4x16x32xf32> -> vector<4x16x128xf32>
    %100 = vector.shape_cast %99 : vector<4x16x128xf32> to vector<64x128xf32>
    %101 = arith.truncf %100 : vector<64x128xf32> to vector<64x128xbf16>
    %c0_22 = arith.constant 0 : index
    %c0_23 = arith.constant 0 : index
    %102 = vector.load %arg3[%c0_22, %c0_23] : memref<128x128xbf16, #tpu.memory_space<vmem>>, vector<128x128xbf16>
    %cst_24 = arith.constant dense<0.000000e+00> : vector<64x128xf32>
    %103 = tpu.matmul %101, %102, %cst_24 {dimension_numbers = #tpu.dot_dimension_numbers<[1], [0], [0], [1], [0, 0, 1, 1], [], []>} : vector<64x128xbf16>, vector<128x128xbf16>, vector<64x128xf32> -> vector<64x128xf32>
    %c0_25 = arith.constant 0 : index
    %c0_26 = arith.constant 0 : index
    %104 = vector.load %arg4[%c0_25, %c0_26] : memref<1x128xf32, #tpu.memory_space<vmem>>, vector<1x128xf32>
    %105 = vector.broadcast %104 : vector<1x128xf32> to vector<64x128xf32>
    %106 = arith.addf %103, %105 : vector<64x128xf32>
    %107 = vector.shape_cast %106 : vector<64x128xf32> to vector<4x16x128xf32>
    %c0_27 = arith.constant 0 : index
    %c0_28 = arith.constant 0 : index
    %c0_29 = arith.constant 0 : index
    %108 = vector.load %arg6[%c0_27, %c0_28, %c0_29] : memref<4x16x128xf32, #tpu.memory_space<vmem>>, vector<4x16x128xf32>
    tpu.vector_store %arg6[%c0_27, %c0_28, %c0_29], %107 {strides = array<i32>} : memref<4x16x128xf32, #tpu.memory_space<vmem>>, vector<4x16x128xf32>,
    return
  }
  func.func @transform_0(%arg0: i32) -> (i32, i32, i32) {
    %c0_i32 = arith.constant 0 : i32
    %c0_i32_0 = arith.constant 0 : i32
    %c0_i32_1 = arith.constant 0 : i32
    return %arg0, %c0_i32, %c0_i32_0 : i32, i32, i32
  }
  func.func @transform_1(%arg0: i32) -> (i32, i32) {
    %c0_i32 = arith.constant 0 : i32
    %c0_i32_0 = arith.constant 0 : i32
    %c0_i32_1 = arith.constant 0 : i32
    return %c0_i32, %c0_i32_0 : i32, i32
  }
  func.func @transform_2(%arg0: i32) -> (i32, i32) {
    %c0_i32 = arith.constant 0 : i32
    %c0_i32_0 = arith.constant 0 : i32
    %c0_i32_1 = arith.constant 0 : i32
    return %c0_i32, %c0_i32_0 : i32, i32
  }
  func.func @transform_3(%arg0: i32) -> (i32, i32) {
    %c0_i32 = arith.constant 0 : i32
    %c0_i32_0 = arith.constant 0 : i32
    %c0_i32_1 = arith.constant 0 : i32
    return %c0_i32, %c0_i32_0 : i32, i32
  }
  func.func @transform_4(%arg0: i32) -> (i32, i32) {
    %c0_i32 = arith.constant 0 : i32
    %c0_i32_0 = arith.constant 0 : i32
    %c0_i32_1 = arith.constant 0 : i32
    return %c0_i32, %c0_i32_0 : i32, i32
  }
  func.func @transform_5(%arg0: i32) -> (i32, i32, i32) {
    %c0_i32 = arith.constant 0 : i32
    %c0_i32_0 = arith.constant 0 : i32
    %c0_i32_1 = arith.constant 0 : i32
    return %arg0, %c0_i32, %c0_i32_0 : i32, i32, i32
  }
}

</mosaic_0001>

<llo_original>
// kernel: tpu_custom_call.1
$region0: #{tpu_custom_call.1}
  #allocation0 [shape = 'u32[]', space=smem, size = 0x4, offset = 0x4, fixed_abs, tag = 'smem constant byte address 0x4 - core index']
  #allocation1 [shape = 'u32[144,128]{1,0:T(1,128)}', space=vmem, size = 0x12000, scoped, tag = 'internal scratch']
  %s0 = inlined_call_operand.hbm [shape: bf16[8,16,128], index: 0, kind: input, shape index: {}]
  %s1 = inlined_call_operand.hbm [shape: bf16[128,384], index: 1, kind: input, shape index: {}]
  %s2 = inlined_call_operand.hbm [shape: bf16[128,128], index: 2, kind: input, shape index: {}]
  %s3 = inlined_call_operand.vmem [shape: f32[1,128], index: 3, kind: input, shape index: {}]
  %s4 = inlined_call_operand.hbm [shape: f32[16,16], index: 4, kind: input, shape index: {}]
  %s5 = inlined_call_operand.hbm [shape: f32[8,16,128], index: 5, kind: output, shape index: {}]
  %s6 = sld [smem:[#allocation0]]
  $region69: #{tpu_custom_call.1} parent=0
    _
  %s8 = ssub.s32 1, %s6
  %s9 = scalar_select 0, %s8, %s6
  $region1: #{tpu_custom_call.1} parent=0
    #allocation2 [shape = 'u8[32768]{0}', space=vmem, size = 0x8000, scoped, tag = 'input window, operand 0']
    #allocation3 [shape = 's32[2]{0}', space=sflag, size = 0x8, scoped, tag = 'scoped memory for tpu_custom_call.1']
    #allocation4 [shape = 's32[2]{0}', space=sflag, size = 0x8, scoped, tag = 'scoped memory for tpu_custom_call.1']
    #allocation5 [shape = 'u8[98304]{0}', space=vmem, size = 0x18000, scoped, tag = 'input window, operand 1, single buffered']
    #allocation6 [shape = 's32[1]{0}', space=sflag, size = 0x4, scoped, tag = 'scoped memory for tpu_custom_call.1']
    #allocation7 [shape = 'u8[32768]{0}', space=vmem, size = 0x8000, scoped, tag = 'input window, operand 2, single buffered']
    #allocation8 [shape = 'u8[8192]{0}', space=vmem, size = 0x2000, scoped, tag = 'input window, operand 4, single buffered']
    #allocation9 [shape = 's32[1]{0}', space=sflag, size = 0x4, scoped, tag = 'scoped memory for tpu_custom_call.1']
    #allocation10 [shape = 'u8[65536]{0}', space=vmem, size = 0x10000, scoped, tag = 'output window, operand 0']
    %10 = vsyncpa [#allocation3], 0
    %s11 = scalar_lea.sflag [#allocation3], 1
    %12 = vsyncpa %s11, 0
    %13 = vsyncpa [#allocation6], 0
    %14 = vsyncpa [#allocation9], 0
    %15 = vsyncpa [#allocation4], 0
    %s16 = scalar_lea.sflag [#allocation4], 1
    %17 = vsyncpa %s16, 0
    loop: start=0, step=1, limit=4
    $region2: #{tpu_custom_call.1} parent=1 // loop_pre_header
      _
    $region3: #{tpu_custom_call.1} parent=1 // loop_header
      %s19 = sphi 0, %s23
      %p20 = scmp.ge.s32.totalorder %s19, 4
      %s29 = sphi 0, %s31
      %s32 = sphi 0, %s29
      %s33 = sphi 0, %s32
      %s49 = sphi 0, %s33
      %s53 = sphi 0, %s53
      %s55 = sphi 0, %s53
      %s56 = sphi 0, %s55
      %s70 = sphi 0, %s56
      %s74 = sphi 0, %s74
      %s76 = sphi 0, %s74
      %s77 = sphi 0, %s76
      %s91 = sphi 0, %s77
      %s95 = sphi 0, %s95
      %s97 = sphi 0, %s95
      %s98 = sphi 0, %s97
      %s112 = sphi 0, %s98
      %s116 = sphi 0, %s116
      %s118 = sphi 0, %s116
      %s119 = sphi 0, %s118
      %s133 = sphi 0, %s119
      %s139 = sphi 0, %s141
      %s142 = sphi 0, %s139
      %s143 = sphi 0, %s142
      %s159 = sphi 0, %s143
    $region4: #{tpu_custom_call.1} parent=1 // loop_header_branch
      %22 = sbr.rel (%p20) target = $region8
    $region5: #{tpu_custom_call.1} parent=1 // loop_body
      %s24 = ssub.s32 %s19, 1
      %s25 = ssub.s32 %s19, 2
      %s26 = sadd.s32 %s19, 1
      %s27 = ssub.s32 %s19, %s26
      %p28 = scmp.eq.s32.totalorder %s27, 0
      %s30 = sadd.s32 %s29, 1
      %s31 = scalar_select %p28, %s29, %s30
      %p34 = pneg %p28
      %p35 = scmp.eq.s32.totalorder %s19, 1
      %p36 = por %p34, %p35
      %p37 = scmp.ne.s32.totalorder %s29, %s32
      %p38 = scmp.eq.s32.totalorder %s19, 0
      %p39 = por %p37, %p38
      %p40 = scmp.ne.s32.totalorder %s29, %s32
      %p41 = scmp.eq.s32.totalorder %s24, 1
      %p42 = por %p40, %p41
      %p43 = scmp.ne.s32.totalorder %s32, %s33
      %p44 = scmp.eq.s32.totalorder %s24, 0
      %p45 = por %p43, %p44
      %p46 = scmp.ne.s32.totalorder %s32, %s33
      %p47 = scmp.eq.s32.totalorder %s25, 1
      %p48 = por %p46, %p47
      %p50 = scmp.ne.s32.totalorder %s33, %s49
      %p51 = scmp.eq.s32.totalorder %s25, 0
      %p52 = por %p50, %p51
      %s54 = sadd.s32 %s53, 1
      %p57 = scmp.eq.s32.totalorder %s19, 1
      %p58 = scmp.ne.s32.totalorder %s53, %s55
      %p59 = scmp.eq.s32.totalorder %s19, 0
      %p60 = por %p58, %p59
      %p61 = scmp.ne.s32.totalorder %s53, %s55
      %p62 = scmp.eq.s32.totalorder %s24, 1
      %p63 = por %p61, %p62
      %p64 = scmp.ne.s32.totalorder %s55, %s56
      %p65 = scmp.eq.s32.totalorder %s24, 0
      %p66 = por %p64, %p65
      %p67 = scmp.ne.s32.totalorder %s55, %s56
      %p68 = scmp.eq.s32.totalorder %s25, 1
      %p69 = por %p67, %p68
      %p71 = scmp.ne.s32.totalorder %s56, %s70
      %p72 = scmp.eq.s32.totalorder %s25, 0
      %p73 = por %p71, %p72
      %s75 = sadd.s32 %s74, 1
      %p78 = scmp.eq.s32.totalorder %s19, 1
      %p79 = scmp.ne.s32.totalorder %s74, %s76
      %p80 = scmp.eq.s32.totalorder %s19, 0
      %p81 = por %p79, %p80
      %p82 = scmp.ne.s32.totalorder %s74, %s76
      %p83 = scmp.eq.s32.totalorder %s24, 1
      %p84 = por %p82, %p83
      %p85 = scmp.ne.s32.totalorder %s76, %s77
      %p86 = scmp.eq.s32.totalorder %s24, 0
      %p87 = por %p85, %p86
      %p88 = scmp.ne.s32.totalorder %s76, %s77
      %p89 = scmp.eq.s32.totalorder %s25, 1
      %p90 = por %p88, %p89
      %p92 = scmp.ne.s32.totalorder %s77, %s91
      %p93 = scmp.eq.s32.totalorder %s25, 0
      %p94 = por %p92, %p93
      %s96 = sadd.s32 %s95, 1
      %p99 = scmp.eq.s32.totalorder %s19, 1
      %p100 = scmp.ne.s32.totalorder %s95, %s97
      %p101 = scmp.eq.s32.totalorder %s19, 0
      %p102 = por %p100, %p101
      %p103 = scmp.ne.s32.totalorder %s95, %s97
      %p104 = scmp.eq.s32.totalorder %s24, 1
      %p105 = por %p103, %p104
      %p106 = scmp.ne.s32.totalorder %s97, %s98
      %p107 = scmp.eq.s32.totalorder %s24, 0
      %p108 = por %p106, %p107
      %p109 = scmp.ne.s32.totalorder %s97, %s98
      %p110 = scmp.eq.s32.totalorder %s25, 1
      %p111 = por %p109, %p110
      %p113 = scmp.ne.s32.totalorder %s98, %s112
      %p114 = scmp.eq.s32.totalorder %s25, 0
      %p115 = por %p113, %p114
      %s117 = sadd.s32 %s116, 1
      %p120 = scmp.eq.s32.totalorder %s19, 1
      %p121 = scmp.ne.s32.totalorder %s116, %s118
      %p122 = scmp.eq.s32.totalorder %s19, 0
      %p123 = por %p121, %p122
      %p124 = scmp.ne.s32.totalorder %s116, %s118
      %p125 = scmp.eq.s32.totalorder %s24, 1
      %p126 = por %p124, %p125
      %p127 = scmp.ne.s32.totalorder %s118, %s119
      %p128 = scmp.eq.s32.totalorder %s24, 0
      %p129 = por %p127, %p128
      %p130 = scmp.ne.s32.totalorder %s118, %s119
      %p131 = scmp.eq.s32.totalorder %s25, 1
      %p132 = por %p130, %p131
      %p134 = scmp.ne.s32.totalorder %s119, %s133
      %p135 = scmp.eq.s32.totalorder %s25, 0
      %p136 = por %p134, %p135
      %s137 = ssub.s32 %s19, %s26
      %p138 = scmp.eq.s32.totalorder %s137, 0
      %s140 = sadd.s32 %s139, 1
      %s141 = scalar_select %p138, %s139, %s140
      %p144 = pneg %p138
      %p145 = scmp.eq.s32.totalorder %s19, 1
      %p146 = por %p144, %p145
      %p147 = scmp.ne.s32.totalorder %s139, %s142
      %p148 = scmp.eq.s32.totalorder %s19, 0
      %p149 = por %p147, %p148
      %p150 = scmp.ne.s32.totalorder %s139, %s142
      %p151 = scmp.eq.s32.totalorder %s24, 1
      %p152 = por %p150, %p151
      %p153 = scmp.ne.s32.totalorder %s142, %s143
      %p154 = scmp.eq.s32.totalorder %s24, 0
      %p155 = por %p153, %p154
      %p156 = scmp.ne.s32.totalorder %s142, %s143
      %p157 = scmp.eq.s32.totalorder %s25, 1
      %p158 = por %p156, %p157
      %p160 = scmp.ne.s32.totalorder %s143, %s159
      %p161 = scmp.eq.s32.totalorder %s25, 0
      %p162 = por %p160, %p161
      %p163 = scmp.le.s32.totalorder 1, %s19
      %p164 = scmp.lt.s32.totalorder %s19, 3
      %p165 = pnand %p163, %p164
      %p166 = pneg %p165
      // Predicated region
      $region9: #{tpu_custom_call.1} parent=5 // pred_check
        _
      $region10: #{tpu_custom_call.1} parent=5 // pred_check_branch
        %168 = sbr.rel (%p165) target = $region12
      $region11: #{tpu_custom_call.1} parent=5 // pred_region
        %s169 = ssub.s32 %s19, 1
        // Predicated region
        $region13: #{tpu_custom_call.1} parent=11 // pred_check
          %p170 = pneg %p66
        $region14: #{tpu_custom_call.1} parent=11 // pred_check_branch
          %172 = sbr.rel (%p170) target = $region16
        $region15: #{tpu_custom_call.1} parent=11 // pred_region
          %s174 = ssub.s32 3072, 3072
          %175 = vsyncadd [#allocation6], %s174
          %s176 = sshll.u32 [#allocation5], 4
          %s177 = int_to_ptr.vmem [resolvable:$true] %s176
          %182 = dma.hbm_to_vmem [thread:$0]  %s1, 3072, %s177, [#allocation6], 192, 192, 12
        $region16: #{tpu_custom_call.1} parent=11 // pred_fallthru
          _
        // Predicated region
        $region17: #{tpu_custom_call.1} parent=11 // pred_check
          %p183 = pneg %p87
        $region18: #{tpu_custom_call.1} parent=11 // pred_check_branch
          %185 = sbr.rel (%p183) target = $region20
        $region19: #{tpu_custom_call.1} parent=11 // pred_region
          %s187 = ssub.s32 1024, 1024
          %188 = vsyncadd [#allocation6], %s187
          %s189 = sshll.u32 [#allocation7], 4
          %s190 = int_to_ptr.vmem [resolvable:$true] %s189
          %195 = dma.hbm_to_vmem [thread:$0]  %s2, 1024, %s190, [#allocation6], 64, 64, 4
        $region20: #{tpu_custom_call.1} parent=11 // pred_fallthru
          _
        // Predicated region
        $region21: #{tpu_custom_call.1} parent=11 // pred_check
          %p196 = pneg %p108
        $region22: #{tpu_custom_call.1} parent=11 // pred_check_branch
          %198 = sbr.rel (%p196) target = $region24
        $region23: #{tpu_custom_call.1} parent=11 // pred_region
          _
        $region24: #{tpu_custom_call.1} parent=11 // pred_fallthru
          _
        // Predicated region
        $region25: #{tpu_custom_call.1} parent=11 // pred_check
          %p199 = pneg %p129
        $region26: #{tpu_custom_call.1} parent=11 // pred_check_branch
          %201 = sbr.rel (%p199) target = $region28
        $region27: #{tpu_custom_call.1} parent=11 // pred_region
          %s203 = ssub.s32 256, 256
          %204 = vsyncadd [#allocation9], %s203
          %s205 = sshll.u32 [#allocation8], 4
          %s206 = int_to_ptr.vmem [resolvable:$true] %s205
          %211 = dma.hbm_to_vmem [thread:$0]  %s4, 256, %s206, [#allocation9], 128, 128, 8
        $region28: #{tpu_custom_call.1} parent=11 // pred_fallthru
          _
      $region12: #{tpu_custom_call.1} parent=5 // pred_fallthru
        _
      %p212 = scmp.lt.s32.totalorder %s19, 2
      // Predicated region
      $region29: #{tpu_custom_call.1} parent=5 // pred_check
        %p213 = pneg %p212
      $region30: #{tpu_custom_call.1} parent=5 // pred_check_branch
        %215 = sbr.rel (%p213) target = $region32
      $region31: #{tpu_custom_call.1} parent=5 // pred_region
        // Predicated region
        $region33: #{tpu_custom_call.1} parent=31 // pred_check
          %p216 = pneg %p39
        $region34: #{tpu_custom_call.1} parent=31 // pred_check_branch
          %218 = sbr.rel (%p216) target = $region36
        $region35: #{tpu_custom_call.1} parent=31 // pred_region
          %s219 = sand.u32 %s29, 1
          %s220 = scalar_lea.sflag [#allocation3], %s219
          %s221 = sand.u32 %s29, 1
          %s222 = smul.addr %s221, 32
          %s223 = scalar_lea.vmem [#allocation2], %s222
          %s224 = smul.u32 4, %s19
          %s226 = ssub.s32 512, 512
          %227 = vsyncadd %s220, %s226
          %s228 = smul.addr %s224, 2
          %s229 = smul.addr %s228, 64
          %s230 = scalar_lea.hbm %s0, %s229
          %s231 = sshll.u32 %s223, 4
          %s232 = int_to_ptr.vmem [resolvable:$true] %s231
          %237 = dma.hbm_to_vmem [thread:$0]  %s230, 512, %s232, %s220, 64, 64, 4
        $region36: #{tpu_custom_call.1} parent=31 // pred_fallthru
          _
      $region32: #{tpu_custom_call.1} parent=5 // pred_fallthru
        _
      %p238 = scmp.le.s32.totalorder 1, %s19
      %p239 = scmp.lt.s32.totalorder %s19, 3
      %p240 = pnand %p238, %p239
      %p241 = pneg %p240
      // Predicated region
      $region37: #{tpu_custom_call.1} parent=5 // pred_check
        _
      $region38: #{tpu_custom_call.1} parent=5 // pred_check_branch
        %243 = sbr.rel (%p240) target = $region40
      $region39: #{tpu_custom_call.1} parent=5 // pred_region
        %s244 = ssub.s32 %s19, 1
        %s245 = sand.u32 %s32, 1
        %s246 = scalar_lea.sflag [#allocation3], %s245
        %s247 = sand.u32 %s32, 1
        %s248 = smul.addr %s247, 32
        %s249 = scalar_lea.vmem [#allocation2], %s248
        // Predicated region
        $region41: #{tpu_custom_call.1} parent=39 // pred_check
          %p250 = pneg %p45
        $region42: #{tpu_custom_call.1} parent=39 // pred_check_branch
          %252 = sbr.rel (%p250) target = $region44
        $region43: #{tpu_custom_call.1} parent=39 // pred_region
          %253 = dma.done %s246, 512
        $region44: #{tpu_custom_call.1} parent=39 // pred_fallthru
          _
        // Predicated region
        $region45: #{tpu_custom_call.1} parent=39 // pred_check
          %p254 = pneg %p66
        $region46: #{tpu_custom_call.1} parent=39 // pred_check_branch
          %256 = sbr.rel (%p254) target = $region48
        $region47: #{tpu_custom_call.1} parent=39 // pred_region
          %257 = dma.done [#allocation6], 3072
        $region48: #{tpu_custom_call.1} parent=39 // pred_fallthru
          _
        // Predicated region
        $region49: #{tpu_custom_call.1} parent=39 // pred_check
          %p258 = pneg %p87
        $region50: #{tpu_custom_call.1} parent=39 // pred_check_branch
          %260 = sbr.rel (%p258) target = $region52
        $region51: #{tpu_custom_call.1} parent=39 // pred_region
          %261 = dma.done [#allocation6], 1024
        $region52: #{tpu_custom_call.1} parent=39 // pred_fallthru
          _
        // Predicated region
        $region53: #{tpu_custom_call.1} parent=39 // pred_check
          %p262 = pneg %p129
        $region54: #{tpu_custom_call.1} parent=39 // pred_check_branch
          %264 = sbr.rel (%p262) target = $region56
        $region55: #{tpu_custom_call.1} parent=39 // pred_region
          %265 = dma.done [#allocation9], 256
        $region56: #{tpu_custom_call.1} parent=39 // pred_fallthru
          _
        %s266 = sand.u32 %s32, 1
        %s267 = scalar_lea.sflag [#allocation3], %s266
        %s268 = sand.u32 %s32, 1
        %s269 = smul.addr %s268, 32
        %s270 = scalar_lea.vmem [#allocation2], %s269
        %p271 = pneg %p45
        %p272 = pneg %p42
        %p273 = pneg %p66
        %p274 = pneg %p63
        %p275 = pneg %p87
        %p276 = pneg %p84
        %p277 = pneg %p108
        %p278 = pneg %p105
        %p279 = pneg %p129
        %p280 = pneg %p126
        %p281 = pneg %p155
        %p282 = pneg %p152
        %s283 = sand.u32 %s142, 1
        %s284 = scalar_lea.sflag [#allocation4], %s283
        %s285 = sand.u32 %s142, 1
        %s286 = smul.addr %s285, 64
        %s287 = scalar_lea.vmem [#allocation10], %s286
        %s288 = smul.u32 4, %s24
        %s289 = smul.u32 4, %s24
        %v291 = vld [vmem:[%s249] sm:$0xf]
        %v292 = vld [vmem:[%s249 + $0x4] sm:$0xf]
        %v293 = vld [vmem:[%s249 + $0x8] sm:$0xf]
        %v294 = vld [vmem:[%s249 + $0xc] sm:$0xf]
        %v295 = vld [vmem:[%s249 + $0x10] sm:$0xf]
        %v296 = vld [vmem:[%s249 + $0x14] sm:$0xf]
        %v297 = vld [vmem:[%s249 + $0x18] sm:$0xf]
        %v298 = vld [vmem:[%s249 + $0x1c] sm:$0xf]
        %v299 = vld [vmem:[#allocation5] sm:$0xff]
        %v300 = vld [vmem:[#allocation5 + $0x8] sm:$0xf]
        %v301 = vld [vmem:[#allocation5 + $0xc] sm:$0xff]
        %v302 = vld [vmem:[#allocation5 + $0x14] sm:$0xf]
        %v303 = vld [vmem:[#allocation5 + $0x18] sm:$0xff]
        %v304 = vld [vmem:[#allocation5 + $0x20] sm:$0xf]
        %v305 = vld [vmem:[#allocation5 + $0x24] sm:$0xff]
        %v306 = vld [vmem:[#allocation5 + $0x2c] sm:$0xf]
        %v307 = vld [vmem:[#allocation5 + $0x30] sm:$0xff]
        %v308 = vld [vmem:[#allocation5 + $0x38] sm:$0xf]
        %v309 = vld [vmem:[#allocation5 + $0x3c] sm:$0xff]
        %v310 = vld [vmem:[#allocation5 + $0x44] sm:$0xf]
        %v311 = vld [vmem:[#allocation5 + $0x48] sm:$0xff]
        %v312 = vld [vmem:[#allocation5 + $0x50] sm:$0xf]
        %v313 = vld [vmem:[#allocation5 + $0x54] sm:$0xff]
        %v314 = vld [vmem:[#allocation5 + $0x5c] sm:$0xf]
        %v315 = vld [vmem:[#allocation5 + $0x60] sm:$0xff]
        %v316 = vld [vmem:[#allocation5 + $0x68] sm:$0xf]
        %v317 = vld [vmem:[#allocation5 + $0x6c] sm:$0xff]
        %v318 = vld [vmem:[#allocation5 + $0x74] sm:$0xf]
        %v319 = vld [vmem:[#allocation5 + $0x78] sm:$0xff]
        %v320 = vld [vmem:[#allocation5 + $0x80] sm:$0xf]
        %v321 = vld [vmem:[#allocation5 + $0x84] sm:$0xff]
        %v322 = vld [vmem:[#allocation5 + $0x8c] sm:$0xf]
        %v323 = vld [vmem:[#allocation5 + $0x90] sm:$0xff]
        %v324 = vld [vmem:[#allocation5 + $0x98] sm:$0xf]
        %v325 = vld [vmem:[#allocation5 + $0x9c] sm:$0xff]
        %v326 = vld [vmem:[#allocation5 + $0xa4] sm:$0xf]
        %v327 = vld [vmem:[#allocation5 + $0xa8] sm:$0xff]
        %v328 = vld [vmem:[#allocation5 + $0xb0] sm:$0xf]
        %v329 = vld [vmem:[#allocation5 + $0xb4] sm:$0xff]
        %v330 = vld [vmem:[#allocation5 + $0xbc] sm:$0xf]
        %v339 = vunpack.c.l.b16 %v291
        %v340 = vunpack.c.l.b16 %v292
        %v341 = vunpack.c.l.b16 %v293
        %v342 = vunpack.c.l.b16 %v294
        %v343 = vunpack.c.l.b16 %v295
        %v344 = vunpack.c.l.b16 %v296
        %v345 = vunpack.c.l.b16 %v297
        %v346 = vunpack.c.l.b16 %v298
        %v347 = vpack.c.b16 %v340, %v339
        %v348 = vpack.c.b16 %v342, %v341
        %v349 = vpack.c.b16 %v344, %v343
        %v350 = vpack.c.b16 %v346, %v345
        %v387 = vunpack.c.l.b16 %v299
        %v388 = vunpack.c.h.b16 %v299
        %v389 = vunpack.c.l.b16 %v300
        %v390 = vunpack.c.l.b16 %v301
        %v391 = vunpack.c.h.b16 %v301
        %v392 = vunpack.c.l.b16 %v302
        %v393 = vunpack.c.l.b16 %v303
        %v394 = vunpack.c.h.b16 %v303
        %v395 = vunpack.c.l.b16 %v304
        %v396 = vunpack.c.l.b16 %v305
        %v397 = vunpack.c.h.b16 %v305
        %v398 = vunpack.c.l.b16 %v306
        %v399 = vunpack.c.l.b16 %v307
        %v400 = vunpack.c.h.b16 %v307
        %v401 = vunpack.c.l.b16 %v308
        %v402 = vunpack.c.l.b16 %v309
        %v403 = vunpack.c.h.b16 %v309
        %v404 = vunpack.c.l.b16 %v310
        %v405 = vunpack.c.l.b16 %v311
        %v406 = vunpack.c.h.b16 %v311
        %v407 = vunpack.c.l.b16 %v312
        %v408 = vunpack.c.l.b16 %v313
        %v409 = vunpack.c.h.b16 %v313
        %v410 = vunpack.c.l.b16 %v314
        %v411 = vunpack.c.l.b16 %v315
        %v412 = vunpack.c.h.b16 %v315
        %v413 = vunpack.c.l.b16 %v316
        %v414 = vunpack.c.l.b16 %v317
        %v415 = vunpack.c.h.b16 %v317
        %v416 = vunpack.c.l.b16 %v318
        %v417 = vunpack.c.l.b16 %v319
        %v418 = vunpack.c.h.b16 %v319
        %v419 = vunpack.c.l.b16 %v320
        %v420 = vunpack.c.l.b16 %v321
        %v421 = vunpack.c.h.b16 %v321
        %v422 = vunpack.c.l.b16 %v322
        %v423 = vunpack.c.l.b16 %v323
        %v424 = vunpack.c.h.b16 %v323
        %v425 = vunpack.c.l.b16 %v324
        %v426 = vunpack.c.l.b16 %v325
        %v427 = vunpack.c.h.b16 %v325
        %v428 = vunpack.c.l.b16 %v326
        %v429 = vunpack.c.l.b16 %v327
        %v430 = vunpack.c.h.b16 %v327
        %v431 = vunpack.c.l.b16 %v328
        %v432 = vunpack.c.l.b16 %v329
        %v433 = vunpack.c.h.b16 %v329
        %v434 = vunpack.c.l.b16 %v330
        %v435 = vpack.c.b16 %v390, %v387
        %v436 = vpack.c.b16 %v391, %v388
        %v437 = vpack.c.b16 %v392, %v389
        %v438 = vpack.c.b16 %v396, %v393
        %v439 = vpack.c.b16 %v397, %v394
        %v440 = vpack.c.b16 %v398, %v395
        %v441 = vpack.c.b16 %v402, %v399
        %v442 = vpack.c.b16 %v403, %v400
        %v443 = vpack.c.b16 %v404, %v401
        %v444 = vpack.c.b16 %v408, %v405
        %v445 = vpack.c.b16 %v409, %v406
        %v446 = vpack.c.b16 %v410, %v407
        %v447 = vpack.c.b16 %v414, %v411
        %v448 = vpack.c.b16 %v415, %v412
        %v449 = vpack.c.b16 %v416, %v413
        %v450 = vpack.c.b16 %v420, %v417
        %v451 = vpack.c.b16 %v421, %v418
        %v452 = vpack.c.b16 %v422, %v419
        %v453 = vpack.c.b16 %v426, %v423
        %v454 = vpack.c.b16 %v427, %v424
        %v455 = vpack.c.b16 %v428, %v425
        %v456 = vpack.c.b16 %v432, %v429
        %v457 = vpack.c.b16 %v433, %v430
        %v458 = vpack.c.b16 %v434, %v431
        %483 = vmatprep.subr.bf16.mxu0 %v436
        %484 = vmatpush1.bf16.msra.mxu0 %v435
        %485 = vmatprep.subr.bf16.mxu0 %v439
        %486 = vmatpush1.bf16.msra.mxu0 %v438
        %487 = vmatprep.subr.bf16.mxu0 %v442
        %488 = vmatpush1.bf16.msra.mxu0 %v441
        %489 = vmatprep.subr.bf16.mxu0 %v445
        %490 = vmatpush1.bf16.msra.mxu0 %v444
        %491 = vmatprep.subr.bf16.mxu0 %v448
        %492 = vmatpush1.bf16.msra.mxu0 %v447
        %493 = vmatprep.subr.bf16.mxu0 %v451
        %494 = vmatpush1.bf16.msra.mxu0 %v450
        %495 = vmatprep.subr.bf16.mxu0 %v454
        %496 = vmatpush1.bf16.msra.mxu0 %v453
        %497 = vmatprep.subr.bf16.mxu0 %v457
        %498 = vmatpush1.bf16.msra.mxu0 %v456
        %499 = vmatprep.subr.bf16.mxu0 0
        %500 = vmatpush1.bf16.msra.mxu0 0
        %501 = vmatprep.subr.bf16.mxu0 0
        %502 = vmatpush1.bf16.msra.mxu0 0
        %503 = vmatprep.subr.bf16.mxu0 0
        %504 = vmatpush1.bf16.msra.mxu0 0
        %505 = vmatprep.subr.bf16.mxu0 0
        %506 = vmatpush1.bf16.msra.mxu0 0
        %507 = vmatprep.subr.bf16.mxu0 0
        %508 = vmatpush1.bf16.msra.mxu0 0
        %509 = vmatprep.subr.bf16.mxu0 0
        %510 = vmatpush1.bf16.msra.mxu0 0
        %511 = vmatprep.subr.bf16.mxu0 0
        %512 = vmatpush1.bf16.msra.mxu0 0
        %513 = vmatprep.subr.bf16.mxu0 0
        %514 = vmatpush1.bf16.msra.mxu0 0
        %515 = vmatprep.mubr.bf16.mxu0 0
        %516 = vmatmul.mubr.bf16.gmra.mrb[0].mxu0 %v347
        %v517 = vpop.f32.mrb[0].mxu0
        %v518 = vadd.f32 0.0, %v517
        %v519 = vpop.f32.mrb[0].mxu0
        %v520 = vadd.f32 0.0, %v519
        %v521 = vpop.f32.mrb[0].mxu0
        %v522 = vadd.f32 0.0, %v521
        %v523 = vpop.f32.mrb[0].mxu0
        %v524 = vadd.f32 0.0, %v523
        %525 = vmatprep.mubr.bf16.mxu0 0
        %526 = vmatmul.mubr.bf16.gmra.mrb[0].mxu0 %v348
        %v527 = vpop.f32.mrb[0].mxu0
        %v528 = vadd.f32 0.0, %v527
        %v529 = vpop.f32.mrb[0].mxu0
        %v530 = vadd.f32 0.0, %v529
        %v531 = vpop.f32.mrb[0].mxu0
        %v532 = vadd.f32 0.0, %v531
        %v533 = vpop.f32.mrb[0].mxu0
        %v534 = vadd.f32 0.0, %v533
        %535 = vmatprep.mubr.bf16.mxu0 0
        %536 = vmatmul.mubr.bf16.gmra.mrb[0].mxu0 %v349
        %v537 = vpop.f32.mrb[0].mxu0
        %v538 = vadd.f32 0.0, %v537
        %v539 = vpop.f32.mrb[0].mxu0
        %v540 = vadd.f32 0.0, %v539
        %v541 = vpop.f32.mrb[0].mxu0
        %v542 = vadd.f32 0.0, %v541
        %v543 = vpop.f32.mrb[0].mxu0
        %v544 = vadd.f32 0.0, %v543
        %545 = vmatprep.mubr.bf16.mxu0 0
        %546 = vmatmul.mubr.bf16.gmra.mrb[0].mxu0 %v350
        %v547 = vpop.f32.mrb[0].mxu0
        %v548 = vadd.f32 0.0, %v547
        %v549 = vpop.f32.mrb[0].mxu0
        %v550 = vadd.f32 0.0, %v549
        %v551 = vpop.f32.mrb[0].mxu0
        %v552 = vadd.f32 0.0, %v551
        %v553 = vpop.f32.mrb[0].mxu0
        %v554 = vadd.f32 0.0, %v553
        %555 = vdwg.mxu0
        %556 = vmatprep.subr.bf16.mxu0 0
        %557 = vmatpush1.bf16.msra.mxu0 %v437
        %558 = vmatprep.subr.bf16.mxu0 0
        %559 = vmatpush1.bf16.msra.mxu0 %v440
        %560 = vmatprep.subr.bf16.mxu0 0
        %561 = vmatpush1.bf16.msra.mxu0 %v443
        %562 = vmatprep.subr.bf16.mxu0 0
        %563 = vmatpush1.bf16.msra.mxu0 %v446
        %564 = vmatprep.subr.bf16.mxu0 0
        %565 = vmatpush1.bf16.msra.mxu0 %v449
        %566 = vmatprep.subr.bf16.mxu0 0
        %567 = vmatpush1.bf16.msra.mxu0 %v452
        %568 = vmatprep.subr.bf16.mxu0 0
        %569 = vmatpush1.bf16.msra.mxu0 %v455
        %570 = vmatprep.subr.bf16.mxu0 0
        %571 = vmatpush1.bf16.msra.mxu0 %v458
        %572 = vmatprep.subr.bf16.mxu0 0
        %573 = vmatpush1.bf16.msra.mxu0 0
        %574 = vmatprep.subr.bf16.mxu0 0
        %575 = vmatpush1.bf16.msra.mxu0 0
        %576 = vmatprep.subr.bf16.mxu0 0
        %577 = vmatpush1.bf16.msra.mxu0 0
        %578 = vmatprep.subr.bf16.mxu0 0
        %579 = vmatpush1.bf16.msra.mxu0 0
        %580 = vmatprep.subr.bf16.mxu0 0
        %581 = vmatpush1.bf16.msra.mxu0 0
        %582 = vmatprep.subr.bf16.mxu0 0
        %583 = vmatpush1.bf16.msra.mxu0 0
        %584 = vmatprep.subr.bf16.mxu0 0
        %585 = vmatpush1.bf16.msra.mxu0 0
        %586 = vmatprep.subr.bf16.mxu0 0
        %587 = vmatpush1.bf16.msra.mxu0 0
        %588 = vmatprep.mubr.bf16.mxu0 0
        %589 = vmatmul.mubr.bf16.gmra.mrb[0].mxu0 %v347
        %v590 = vpop.f32.mrb[0].mxu0
        %v591 = vadd.f32 0.0, %v590
        %v592 = vpop.f32.mrb[0].mxu0
        %v593 = vpop.f32.mrb[0].mxu0
        %v594 = vadd.f32 0.0, %v593
        %v595 = vpop.f32.mrb[0].mxu0
        %596 = vmatprep.mubr.bf16.mxu0 0
        %597 = vmatmul.mubr.bf16.gmra.mrb[0].mxu0 %v348
        %v598 = vpop.f32.mrb[0].mxu0
        %v599 = vadd.f32 0.0, %v598
        %v600 = vpop.f32.mrb[0].mxu0
        %v601 = vpop.f32.mrb[0].mxu0
        %v602 = vadd.f32 0.0, %v601
        %v603 = vpop.f32.mrb[0].mxu0
        %604 = vmatprep.mubr.bf16.mxu0 0
        %605 = vmatmul.mubr.bf16.gmra.mrb[0].mxu0 %v349
        %v606 = vpop.f32.mrb[0].mxu0
        %v607 = vadd.f32 0.0, %v606
        %v608 = vpop.f32.mrb[0].mxu0
        %v609 = vpop.f32.mrb[0].mxu0
        %v610 = vadd.f32 0.0, %v609
        %v611 = vpop.f32.mrb[0].mxu0
        %612 = vmatprep.mubr.bf16.mxu0 0
        %613 = vmatmul.mubr.bf16.gmra.mrb[0].mxu0 %v350
        %v614 = vpop.f32.mrb[0].mxu0
        %v615 = vadd.f32 0.0, %v614
        %v616 = vpop.f32.mrb[0].mxu0
        %v617 = vpop.f32.mrb[0].mxu0
        %v618 = vadd.f32 0.0, %v617
        %v619 = vpop.f32.mrb[0].mxu0
        %620 = vdwg.mxu0
        %v621 = vld [vmem:[#allocation8] sm:$0xff]
        %v622 = vld [vmem:[#allocation8 + $0x8] sm:$0xff]
        %v623 = vpack.c.bf16 %v522, %v518
        %v624 = vpack.c.bf16 %v532, %v528
        %v625 = vpack.c.bf16 %v542, %v538
        %v626 = vpack.c.bf16 %v552, %v548
        %v627 = vpack.c.bf16 %v524, %v520
        %v628 = vpack.c.bf16 %v534, %v530
        %v629 = vpack.c.bf16 %v544, %v540
        %v630 = vpack.c.bf16 %v554, %v550
        %v631 = vpack.c.bf16 %v594, %v591
        %v632 = vpack.c.bf16 %v602, %v599
        %v633 = vpack.c.bf16 %v610, %v607
        %v634 = vpack.c.bf16 %v618, %v615
        %vm635 = vcmask 261120
        %v637 = vsel %vm635, %v623, 0
        %v640 = vsel %vm635, %v627, 0
        %642 = vmatprep.subr.bf16.mxu0 0
        %643 = vmatpush1.bf16.xpose.msra.mxu0 %v640
        %644 = vmatprep.subr.bf16.mxu0 0
        %645 = vmatpush1.bf16.xpose.msra.mxu0 0
        %646 = vmatprep.subr.bf16.mxu0 0
        %647 = vmatpush1.bf16.xpose.msra.mxu0 0
        %648 = vmatprep.subr.bf16.mxu0 0
        %649 = vmatpush1.bf16.xpose.msra.mxu0 0
        %650 = vmatprep.subr.bf16.mxu0 0
        %651 = vmatpush1.bf16.xpose.msra.mxu0 0
        %652 = vmatprep.subr.bf16.mxu0 0
        %653 = vmatpush1.bf16.xpose.msra.mxu0 0
        %654 = vmatprep.subr.bf16.mxu0 0
        %655 = vmatpush1.bf16.xpose.msra.mxu0 0
        %656 = vmatprep.subr.bf16.mxu0 0
        %657 = vmatpush1.bf16.xpose.msra.mxu0 0
        %658 = vmatprep.subr.bf16.mxu0 0
        %659 = vmatpush1.bf16.xpose.msra.mxu0 0
        %660 = vmatprep.subr.bf16.mxu0 0
        %661 = vmatpush1.bf16.xpose.msra.mxu0 0
        %662 = vmatprep.subr.bf16.mxu0 0
        %663 = vmatpush1.bf16.xpose.msra.mxu0 0
        %664 = vmatprep.subr.bf16.mxu0 0
        %665 = vmatpush1.bf16.xpose.msra.mxu0 0
        %666 = vmatprep.subr.bf16.mxu0 0
        %667 = vmatpush1.bf16.xpose.msra.mxu0 0
        %668 = vmatprep.subr.bf16.mxu0 0
        %669 = vmatpush1.bf16.xpose.msra.mxu0 0
        %670 = vmatprep.subr.bf16.mxu0 0
        %671 = vmatpush1.bf16.xpose.msra.mxu0 0
        %672 = vmatprep.subr.bf16.mxu0 0
        %673 = vmatpush1.bf16.xpose.msra.mxu0 0
        %674 = vmatprep.mubr.bf16.mxu0 0
        %675 = vmatmul.mubr.bf16.gmra.mrb[0].mxu0 %v637
        %v676 = vpop.f32.mrb[0].mxu0
        %v677 = vadd.f32 %v621, %v676
        %v678 = vpop.f32.mrb[0].mxu0
        %v679 = vpop.f32.mrb[0].mxu0
        %v680 = vadd.f32 %v622, %v679
        %v681 = vpop.f32.mrb[0].mxu0
        %682 = vdwg.mxu0
        %v684 = vsel %vm635, %v624, 0
        %v687 = vsel %vm635, %v628, 0
        %689 = vmatprep.subr.bf16.mxu0 0
        %690 = vmatpush1.bf16.xpose.msra.mxu0 %v687
        %691 = vmatprep.subr.bf16.mxu0 0
        %692 = vmatpush1.bf16.xpose.msra.mxu0 0
        %693 = vmatprep.subr.bf16.mxu0 0
        %694 = vmatpush1.bf16.xpose.msra.mxu0 0
        %695 = vmatprep.subr.bf16.mxu0 0
        %696 = vmatpush1.bf16.xpose.msra.mxu0 0
        %697 = vmatprep.subr.bf16.mxu0 0
        %698 = vmatpush1.bf16.xpose.msra.mxu0 0
        %699 = vmatprep.subr.bf16.mxu0 0
        %700 = vmatpush1.bf16.xpose.msra.mxu0 0
        %701 = vmatprep.subr.bf16.mxu0 0
        %702 = vmatpush1.bf16.xpose.msra.mxu0 0
        %703 = vmatprep.subr.bf16.mxu0 0
        %704 = vmatpush1.bf16.xpose.msra.mxu0 0
        %705 = vmatprep.subr.bf16.mxu0 0
        %706 = vmatpush1.bf16.xpose.msra.mxu0 0
        %707 = vmatprep.subr.bf16.mxu0 0
        %708 = vmatpush1.bf16.xpose.msra.mxu0 0
        %709 = vmatprep.subr.bf16.mxu0 0
        %710 = vmatpush1.bf16.xpose.msra.mxu0 0
        %711 = vmatprep.subr.bf16.mxu0 0
        %712 = vmatpush1.bf16.xpose.msra.mxu0 0
        %713 = vmatprep.subr.bf16.mxu0 0
        %714 = vmatpush1.bf16.xpose.msra.mxu0 0
        %715 = vmatprep.subr.bf16.mxu0 0
        %716 = vmatpush1.bf16.xpose.msra.mxu0 0
        %717 = vmatprep.subr.bf16.mxu0 0
        %718 = vmatpush1.bf16.xpose.msra.mxu0 0
        %719 = vmatprep.subr.bf16.mxu0 0
        %720 = vmatpush1.bf16.xpose.msra.mxu0 0
        %721 = vmatprep.mubr.bf16.mxu0 0
        %722 = vmatmul.mubr.bf16.gmra.mrb[0].mxu0 %v684
        %v723 = vpop.f32.mrb[0].mxu0
        %v724 = vadd.f32 %v621, %v723
        %v725 = vpop.f32.mrb[0].mxu0
        %v726 = vpop.f32.mrb[0].mxu0
        %v727 = vadd.f32 %v622, %v726
        %v728 = vpop.f32.mrb[0].mxu0
        %729 = vdwg.mxu0
        %v731 = vsel %vm635, %v625, 0
        %v734 = vsel %vm635, %v629, 0
        %736 = vmatprep.subr.bf16.mxu0 0
        %737 = vmatpush1.bf16.xpose.msra.mxu0 %v734
        %738 = vmatprep.subr.bf16.mxu0 0
        %739 = vmatpush1.bf16.xpose.msra.mxu0 0
        %740 = vmatprep.subr.bf16.mxu0 0
        %741 = vmatpush1.bf16.xpose.msra.mxu0 0
        %742 = vmatprep.subr.bf16.mxu0 0
        %743 = vmatpush1.bf16.xpose.msra.mxu0 0
        %744 = vmatprep.subr.bf16.mxu0 0
        %745 = vmatpush1.bf16.xpose.msra.mxu0 0
        %746 = vmatprep.subr.bf16.mxu0 0
        %747 = vmatpush1.bf16.xpose.msra.mxu0 0
        %748 = vmatprep.subr.bf16.mxu0 0
        %749 = vmatpush1.bf16.xpose.msra.mxu0 0
        %750 = vmatprep.subr.bf16.mxu0 0
        %751 = vmatpush1.bf16.xpose.msra.mxu0 0
        %752 = vmatprep.subr.bf16.mxu0 0
        %753 = vmatpush1.bf16.xpose.msra.mxu0 0
        %754 = vmatprep.subr.bf16.mxu0 0
        %755 = vmatpush1.bf16.xpose.msra.mxu0 0
        %756 = vmatprep.subr.bf16.mxu0 0
        %757 = vmatpush1.bf16.xpose.msra.mxu0 0
        %758 = vmatprep.subr.bf16.mxu0 0
        %759 = vmatpush1.bf16.xpose.msra.mxu0 0
        %760 = vmatprep.subr.bf16.mxu0 0
        %761 = vmatpush1.bf16.xpose.msra.mxu0 0
        %762 = vmatprep.subr.bf16.mxu0 0
        %763 = vmatpush1.bf16.xpose.msra.mxu0 0
        %764 = vmatprep.subr.bf16.mxu0 0
        %765 = vmatpush1.bf16.xpose.msra.mxu0 0
        %766 = vmatprep.subr.bf16.mxu0 0
        %767 = vmatpush1.bf16.xpose.msra.mxu0 0
        %768 = vmatprep.mubr.bf16.mxu0 0
        %769 = vmatmul.mubr.bf16.gmra.mrb[0].mxu0 %v731
        %v770 = vpop.f32.mrb[0].mxu0
        %v771 = vadd.f32 %v621, %v770
        %v772 = vpop.f32.mrb[0].mxu0
        %v773 = vpop.f32.mrb[0].mxu0
        %v774 = vadd.f32 %v622, %v773
        %v775 = vpop.f32.mrb[0].mxu0
        %776 = vdwg.mxu0
        %v778 = vsel %vm635, %v626, 0
        %v781 = vsel %vm635, %v630, 0
        %783 = vmatprep.subr.bf16.mxu0 0
        %784 = vmatpush1.bf16.xpose.msra.mxu0 %v781
        %785 = vmatprep.subr.bf16.mxu0 0
        %786 = vmatpush1.bf16.xpose.msra.mxu0 0
        %787 = vmatprep.subr.bf16.mxu0 0
        %788 = vmatpush1.bf16.xpose.msra.mxu0 0
        %789 = vmatprep.subr.bf16.mxu0 0
        %790 = vmatpush1.bf16.xpose.msra.mxu0 0
        %791 = vmatprep.subr.bf16.mxu0 0
        %792 = vmatpush1.bf16.xpose.msra.mxu0 0
        %793 = vmatprep.subr.bf16.mxu0 0
        %794 = vmatpush1.bf16.xpose.msra.mxu0 0
        %795 = vmatprep.subr.bf16.mxu0 0
        %796 = vmatpush1.bf16.xpose.msra.mxu0 0
        %797 = vmatprep.subr.bf16.mxu0 0
        %798 = vmatpush1.bf16.xpose.msra.mxu0 0
        %799 = vmatprep.subr.bf16.mxu0 0
        %800 = vmatpush1.bf16.xpose.msra.mxu0 0
        %801 = vmatprep.subr.bf16.mxu0 0
        %802 = vmatpush1.bf16.xpose.msra.mxu0 0
        %803 = vmatprep.subr.bf16.mxu0 0
        %804 = vmatpush1.bf16.xpose.msra.mxu0 0
        %805 = vmatprep.subr.bf16.mxu0 0
        %806 = vmatpush1.bf16.xpose.msra.mxu0 0
        %807 = vmatprep.subr.bf16.mxu0 0
        %808 = vmatpush1.bf16.xpose.msra.mxu0 0
        %809 = vmatprep.subr.bf16.mxu0 0
        %810 = vmatpush1.bf16.xpose.msra.mxu0 0
        %811 = vmatprep.subr.bf16.mxu0 0
        %812 = vmatpush1.bf16.xpose.msra.mxu0 0
        %813 = vmatprep.subr.bf16.mxu0 0
        %814 = vmatpush1.bf16.xpose.msra.mxu0 0
        %815 = vmatprep.mubr.bf16.mxu0 0
        %816 = vmatmul.mubr.bf16.gmra.mrb[0].mxu0 %v778
        %v817 = vpop.f32.mrb[0].mxu0
        %v818 = vadd.f32 %v621, %v817
        %v819 = vpop.f32.mrb[0].mxu0
        %v820 = vpop.f32.mrb[0].mxu0
        %v821 = vadd.f32 %v622, %v820
        %v822 = vpop.f32.mrb[0].mxu0
        %823 = vdwg.mxu0
        %vm824 = vcmask 130048
        %v825 = vsel %vm824, %v677, -inf
        %826 = vmax.xlane.f32.xlu0 %v825
        %v827 = vpop.xlane.xlu0 %826
        %v828 = vsel %vm824, %v680, -inf
        %829 = vmax.xlane.f32.xlu0 %v828
        %v830 = vpop.xlane.xlu0 %829
        %v831 = vsel %vm824, %v724, -inf
        %832 = vmax.xlane.f32.xlu0 %v831
        %v833 = vpop.xlane.xlu0 %832
        %v834 = vsel %vm824, %v727, -inf
        %835 = vmax.xlane.f32.xlu0 %v834
        %v836 = vpop.xlane.xlu0 %835
        %v837 = vsel %vm824, %v771, -inf
        %838 = vmax.xlane.f32.xlu0 %v837
        %v839 = vpop.xlane.xlu0 %838
        %v840 = vsel %vm824, %v774, -inf
        %841 = vmax.xlane.f32.xlu0 %v840
        %v842 = vpop.xlane.xlu0 %841
        %v843 = vsel %vm824, %v818, -inf
        %844 = vmax.xlane.f32.xlu0 %v843
        %v845 = vpop.xlane.xlu0 %844
        %v846 = vsel %vm824, %v821, -inf
        %847 = vmax.xlane.f32.xlu0 %v846
        %v848 = vpop.xlane.xlu0 %847
        %v849 = vsub.f32 %v677, %v827
        %v850 = vsub.f32 %v680, %v830
        %v851 = vsub.f32 %v724, %v833
        %v852 = vsub.f32 %v727, %v836
        %v853 = vsub.f32 %v771, %v839
        %v854 = vsub.f32 %v774, %v842
        %v855 = vsub.f32 %v818, %v845
        %v856 = vsub.f32 %v821, %v848
        %v857 = vmul.f32 %v849, 1.442695
        %v858 = vpow.pop %v857
        %v859 = vmul.f32 %v850, 1.442695
        %v860 = vpow.pop %v859
        %v861 = vmul.f32 %v851, 1.442695
        %v862 = vpow.pop %v861
        %v863 = vmul.f32 %v852, 1.442695
        %v864 = vpow.pop %v863
        %v865 = vmul.f32 %v853, 1.442695
        %v866 = vpow.pop %v865
        %v867 = vmul.f32 %v854, 1.442695
        %v868 = vpow.pop %v867
        %v869 = vmul.f32 %v855, 1.442695
        %v870 = vpow.pop %v869
        %v871 = vmul.f32 %v856, 1.442695
        %v872 = vpow.pop %v871
        %v873 = vsel %vm824, %v858, 0.0
        %874 = vadd.xlane.f32.xlu0 %v873
        %v875 = vpop.xlane.xlu0 %874
        %v876 = vsel %vm824, %v860, 0.0
        %877 = vadd.xlane.f32.xlu0 %v876
        %v878 = vpop.xlane.xlu0 %877
        %v879 = vsel %vm824, %v862, 0.0
        %880 = vadd.xlane.f32.xlu0 %v879
        %v881 = vpop.xlane.xlu0 %880
        %v882 = vsel %vm824, %v864, 0.0
        %883 = vadd.xlane.f32.xlu0 %v882
        %v884 = vpop.xlane.xlu0 %883
        %v885 = vsel %vm824, %v866, 0.0
        %886 = vadd.xlane.f32.xlu0 %v885
        %v887 = vpop.xlane.xlu0 %886
        %v888 = vsel %vm824, %v868, 0.0
        %889 = vadd.xlane.f32.xlu0 %v888
        %v890 = vpop.xlane.xlu0 %889
        %v891 = vsel %vm824, %v870, 0.0
        %892 = vadd.xlane.f32.xlu0 %v891
        %v893 = vpop.xlane.xlu0 %892
        %v894 = vsel %vm824, %v872, 0.0
        %895 = vadd.xlane.f32.xlu0 %v894
        %v896 = vpop.xlane.xlu0 %895
        %v897 = vrcp.pop %v875
        %v898 = vrcp.pop %v878
        %v899 = vrcp.pop %v881
        %v900 = vrcp.pop %v884
        %v901 = vrcp.pop %v887
        %v902 = vrcp.pop %v890
        %v903 = vrcp.pop %v893
        %v904 = vrcp.pop %v896
        %v905 = vmul.f32 %v858, %v897
        %v906 = vmul.f32 %v860, %v898
        %v907 = vmul.f32 %v862, %v899
        %v908 = vmul.f32 %v864, %v900
        %v909 = vmul.f32 %v866, %v901
        %v910 = vmul.f32 %v868, %v902
        %v911 = vmul.f32 %v870, %v903
        %v912 = vmul.f32 %v872, %v904
        %v913 = vpack.c.bf16 %v906, %v905
        %v914 = vpack.c.bf16 %v908, %v907
        %v915 = vpack.c.bf16 %v910, %v909
        %v916 = vpack.c.bf16 %v912, %v911
        %v918 = vsel %vm824, %v913, 0
        %920 = vmatprep.subr.bf16.mxu0 0
        %921 = vmatpush1.bf16.msra.mxu0 %v631
        %922 = vmatprep.subr.bf16.mxu0 0
        %923 = vmatpush1.bf16.msra.mxu0 0
        %924 = vmatprep.subr.bf16.mxu0 0
        %925 = vmatpush1.bf16.msra.mxu0 0
        %926 = vmatprep.subr.bf16.mxu0 0
        %927 = vmatpush1.bf16.msra.mxu0 0
        %928 = vmatprep.subr.bf16.mxu0 0
        %929 = vmatpush1.bf16.msra.mxu0 0
        %930 = vmatprep.subr.bf16.mxu0 0
        %931 = vmatpush1.bf16.msra.mxu0 0
        %932 = vmatprep.subr.bf16.mxu0 0
        %933 = vmatpush1.bf16.msra.mxu0 0
        %934 = vmatprep.subr.bf16.mxu0 0
        %935 = vmatpush1.bf16.msra.mxu0 0
        %936 = vmatprep.subr.bf16.mxu0 0
        %937 = vmatpush1.bf16.msra.mxu0 0
        %938 = vmatprep.subr.bf16.mxu0 0
        %939 = vmatpush1.bf16.msra.mxu0 0
        %940 = vmatprep.subr.bf16.mxu0 0
        %941 = vmatpush1.bf16.msra.mxu0 0
        %942 = vmatprep.subr.bf16.mxu0 0
        %943 = vmatpush1.bf16.msra.mxu0 0
        %944 = vmatprep.subr.bf16.mxu0 0
        %945 = vmatpush1.bf16.msra.mxu0 0
        %946 = vmatprep.subr.bf16.mxu0 0
        %947 = vmatpush1.bf16.msra.mxu0 0
        %948 = vmatprep.subr.bf16.mxu0 0
        %949 = vmatpush1.bf16.msra.mxu0 0
        %950 = vmatprep.subr.bf16.mxu0 0
        %951 = vmatpush1.bf16.msra.mxu0 0
        %952 = vmatprep.mubr.bf16.mxu0 0
        %953 = vmatmul.mubr.bf16.gmra.mrb[0].mxu0 %v918
        %v954 = vpop.f32.mrb[0].mxu0
        %v955 = vadd.f32 0.0, %v954
        %v956 = vpop.f32.mrb[0].mxu0
        %v957 = vpop.f32.mrb[0].mxu0
        %v958 = vadd.f32 0.0, %v957
        %v959 = vpop.f32.mrb[0].mxu0
        %960 = vdwg.mxu0
        %v962 = vsel %vm824, %v914, 0
        %964 = vmatprep.subr.bf16.mxu0 0
        %965 = vmatpush1.bf16.msra.mxu0 %v632
        %966 = vmatprep.subr.bf16.mxu0 0
        %967 = vmatpush1.bf16.msra.mxu0 0
        %968 = vmatprep.subr.bf16.mxu0 0
        %969 = vmatpush1.bf16.msra.mxu0 0
        %970 = vmatprep.subr.bf16.mxu0 0
        %971 = vmatpush1.bf16.msra.mxu0 0
        %972 = vmatprep.subr.bf16.mxu0 0
        %973 = vmatpush1.bf16.msra.mxu0 0
        %974 = vmatprep.subr.bf16.mxu0 0
        %975 = vmatpush1.bf16.msra.mxu0 0
        %976 = vmatprep.subr.bf16.mxu0 0
        %977 = vmatpush1.bf16.msra.mxu0 0
        %978 = vmatprep.subr.bf16.mxu0 0
        %979 = vmatpush1.bf16.msra.mxu0 0
        %980 = vmatprep.subr.bf16.mxu0 0
        %981 = vmatpush1.bf16.msra.mxu0 0
        %982 = vmatprep.subr.bf16.mxu0 0
        %983 = vmatpush1.bf16.msra.mxu0 0
        %984 = vmatprep.subr.bf16.mxu0 0
        %985 = vmatpush1.bf16.msra.mxu0 0
        %986 = vmatprep.subr.bf16.mxu0 0
        %987 = vmatpush1.bf16.msra.mxu0 0
        %988 = vmatprep.subr.bf16.mxu0 0
        %989 = vmatpush1.bf16.msra.mxu0 0
        %990 = vmatprep.subr.bf16.mxu0 0
        %991 = vmatpush1.bf16.msra.mxu0 0
        %992 = vmatprep.subr.bf16.mxu0 0
        %993 = vmatpush1.bf16.msra.mxu0 0
        %994 = vmatprep.subr.bf16.mxu0 0
        %995 = vmatpush1.bf16.msra.mxu0 0
        %996 = vmatprep.mubr.bf16.mxu0 0
        %997 = vmatmul.mubr.bf16.gmra.mrb[0].mxu0 %v962
        %v998 = vpop.f32.mrb[0].mxu0
        %v999 = vadd.f32 0.0, %v998
        %v1000 = vpop.f32.mrb[0].mxu0
        %v1001 = vpop.f32.mrb[0].mxu0
        %v1002 = vadd.f32 0.0, %v1001
        %v1003 = vpop.f32.mrb[0].mxu0
        %1004 = vdwg.mxu0
        %v1006 = vsel %vm824, %v915, 0
        %1008 = vmatprep.subr.bf16.mxu0 0
        %1009 = vmatpush1.bf16.msra.mxu0 %v633
        %1010 = vmatprep.subr.bf16.mxu0 0
        %1011 = vmatpush1.bf16.msra.mxu0 0
        %1012 = vmatprep.subr.bf16.mxu0 0
        %1013 = vmatpush1.bf16.msra.mxu0 0
        %1014 = vmatprep.subr.bf16.mxu0 0
        %1015 = vmatpush1.bf16.msra.mxu0 0
        %1016 = vmatprep.subr.bf16.mxu0 0
        %1017 = vmatpush1.bf16.msra.mxu0 0
        %1018 = vmatprep.subr.bf16.mxu0 0
        %1019 = vmatpush1.bf16.msra.mxu0 0
        %1020 = vmatprep.subr.bf16.mxu0 0
        %1021 = vmatpush1.bf16.msra.mxu0 0
        %1022 = vmatprep.subr.bf16.mxu0 0
        %1023 = vmatpush1.bf16.msra.mxu0 0
        %1024 = vmatprep.subr.bf16.mxu0 0
        %1025 = vmatpush1.bf16.msra.mxu0 0
        %1026 = vmatprep.subr.bf16.mxu0 0
        %1027 = vmatpush1.bf16.msra.mxu0 0
        %1028 = vmatprep.subr.bf16.mxu0 0
        %1029 = vmatpush1.bf16.msra.mxu0 0
        %1030 = vmatprep.subr.bf16.mxu0 0
        %1031 = vmatpush1.bf16.msra.mxu0 0
        %1032 = vmatprep.subr.bf16.mxu0 0
        %1033 = vmatpush1.bf16.msra.mxu0 0
        %1034 = vmatprep.subr.bf16.mxu0 0
        %1035 = vmatpush1.bf16.msra.mxu0 0
        %1036 = vmatprep.subr.bf16.mxu0 0
        %1037 = vmatpush1.bf16.msra.mxu0 0
        %1038 = vmatprep.subr.bf16.mxu0 0
        %1039 = vmatpush1.bf16.msra.mxu0 0
        %1040 = vmatprep.mubr.bf16.mxu0 0
        %1041 = vmatmul.mubr.bf16.gmra.mrb[0].mxu0 %v1006
        %v1042 = vpop.f32.mrb[0].mxu0
        %v1043 = vadd.f32 0.0, %v1042
        %v1044 = vpop.f32.mrb[0].mxu0
        %v1045 = vpop.f32.mrb[0].mxu0
        %v1046 = vadd.f32 0.0, %v1045
        %v1047 = vpop.f32.mrb[0].mxu0
        %1048 = vdwg.mxu0
        %v1050 = vsel %vm824, %v916, 0
        %1052 = vmatprep.subr.bf16.mxu0 0
        %1053 = vmatpush1.bf16.msra.mxu0 %v634
        %1054 = vmatprep.subr.bf16.mxu0 0
        %1055 = vmatpush1.bf16.msra.mxu0 0
        %1056 = vmatprep.subr.bf16.mxu0 0
        %1057 = vmatpush1.bf16.msra.mxu0 0
        %1058 = vmatprep.subr.bf16.mxu0 0
        %1059 = vmatpush1.bf16.msra.mxu0 0
        %1060 = vmatprep.subr.bf16.mxu0 0
        %1061 = vmatpush1.bf16.msra.mxu0 0
        %1062 = vmatprep.subr.bf16.mxu0 0
        %1063 = vmatpush1.bf16.msra.mxu0 0
        %1064 = vmatprep.subr.bf16.mxu0 0
        %1065 = vmatpush1.bf16.msra.mxu0 0
        %1066 = vmatprep.subr.bf16.mxu0 0
        %1067 = vmatpush1.bf16.msra.mxu0 0
        %1068 = vmatprep.subr.bf16.mxu0 0
        %1069 = vmatpush1.bf16.msra.mxu0 0
        %1070 = vmatprep.subr.bf16.mxu0 0
        %1071 = vmatpush1.bf16.msra.mxu0 0
        %1072 = vmatprep.subr.bf16.mxu0 0
        %1073 = vmatpush1.bf16.msra.mxu0 0
        %1074 = vmatprep.subr.bf16.mxu0 0
        %1075 = vmatpush1.bf16.msra.mxu0 0
        %1076 = vmatprep.subr.bf16.mxu0 0
        %1077 = vmatpush1.bf16.msra.mxu0 0
        %1078 = vmatprep.subr.bf16.mxu0 0
        %1079 = vmatpush1.bf16.msra.mxu0 0
        %1080 = vmatprep.subr.bf16.mxu0 0
        %1081 = vmatpush1.bf16.msra.mxu0 0
        %1082 = vmatprep.subr.bf16.mxu0 0
        %1083 = vmatpush1.bf16.msra.mxu0 0
        %1084 = vmatprep.mubr.bf16.mxu0 0
        %1085 = vmatmul.mubr.bf16.gmra.mrb[0].mxu0 %v1050
        %v1086 = vpop.f32.mrb[0].mxu0
        %v1087 = vadd.f32 0.0, %v1086
        %v1088 = vpop.f32.mrb[0].mxu0
        %v1089 = vpop.f32.mrb[0].mxu0
        %v1090 = vadd.f32 0.0, %v1089
        %v1091 = vpop.f32.mrb[0].mxu0
        %1092 = vdwg.mxu0
        %1094 = vrot.lane.b32.xlu0 %v623, 96
        %v1095 = vpop.permute.xlu0 %1094
        %1097 = vrot.lane.b32.xlu0 %v627, 96
        %v1098 = vpop.permute.xlu0 %1097
        %v1100 = vsel %vm635, %v1095, 0
        %v1103 = vsel %vm635, %v1098, 0
        %1105 = vmatprep.subr.bf16.mxu0 0
        %1106 = vmatpush1.bf16.xpose.msra.mxu0 %v1103
        %1107 = vmatprep.subr.bf16.mxu0 0
        %1108 = vmatpush1.bf16.xpose.msra.mxu0 0
        %1109 = vmatprep.subr.bf16.mxu0 0
        %1110 = vmatpush1.bf16.xpose.msra.mxu0 0
        %1111 = vmatprep.subr.bf16.mxu0 0
        %1112 = vmatpush1.bf16.xpose.msra.mxu0 0
        %1113 = vmatprep.subr.bf16.mxu0 0
        %1114 = vmatpush1.bf16.xpose.msra.mxu0 0
        %1115 = vmatprep.subr.bf16.mxu0 0
        %1116 = vmatpush1.bf16.xpose.msra.mxu0 0
        %1117 = vmatprep.subr.bf16.mxu0 0
        %1118 = vmatpush1.bf16.xpose.msra.mxu0 0
        %1119 = vmatprep.subr.bf16.mxu0 0
        %1120 = vmatpush1.bf16.xpose.msra.mxu0 0
        %1121 = vmatprep.subr.bf16.mxu0 0
        %1122 = vmatpush1.bf16.xpose.msra.mxu0 0
        %1123 = vmatprep.subr.bf16.mxu0 0
        %1124 = vmatpush1.bf16.xpose.msra.mxu0 0
        %1125 = vmatprep.subr.bf16.mxu0 0
        %1126 = vmatpush1.bf16.xpose.msra.mxu0 0
        %1127 = vmatprep.subr.bf16.mxu0 0
        %1128 = vmatpush1.bf16.xpose.msra.mxu0 0
        %1129 = vmatprep.subr.bf16.mxu0 0
        %1130 = vmatpush1.bf16.xpose.msra.mxu0 0
        %1131 = vmatprep.subr.bf16.mxu0 0
        %1132 = vmatpush1.bf16.xpose.msra.mxu0 0
        %1133 = vmatprep.subr.bf16.mxu0 0
        %1134 = vmatpush1.bf16.xpose.msra.mxu0 0
        %1135 = vmatprep.subr.bf16.mxu0 0
        %1136 = vmatpush1.bf16.xpose.msra.mxu0 0
        %1137 = vmatprep.mubr.bf16.mxu0 0
        %1138 = vmatmul.mubr.bf16.gmra.mrb[0].mxu0 %v1100
        %v1139 = vpop.f32.mrb[0].mxu0
        %v1140 = vadd.f32 %v621, %v1139
        %v1141 = vpop.f32.mrb[0].mxu0
        %v1142 = vpop.f32.mrb[0].mxu0
        %v1143 = vadd.f32 %v622, %v1142
        %v1144 = vpop.f32.mrb[0].mxu0
        %1145 = vdwg.mxu0
        %1147 = vrot.lane.b32.xlu0 %v624, 96
        %v1148 = vpop.permute.xlu0 %1147
        %1150 = vrot.lane.b32.xlu0 %v628, 96
        %v1151 = vpop.permute.xlu0 %1150
        %v1153 = vsel %vm635, %v1148, 0
        %v1156 = vsel %vm635, %v1151, 0
        %1158 = vmatprep.subr.bf16.mxu0 0
        %1159 = vmatpush1.bf16.xpose.msra.mxu0 %v1156
        %1160 = vmatprep.subr.bf16.mxu0 0
        %1161 = vmatpush1.bf16.xpose.msra.mxu0 0
        %1162 = vmatprep.subr.bf16.mxu0 0
        %1163 = vmatpush1.bf16.xpose.msra.mxu0 0
        %1164 = vmatprep.subr.bf16.mxu0 0
        %1165 = vmatpush1.bf16.xpose.msra.mxu0 0
        %1166 = vmatprep.subr.bf16.mxu0 0
        %1167 = vmatpush1.bf16.xpose.msra.mxu0 0
        %1168 = vmatprep.subr.bf16.mxu0 0
        %1169 = vmatpush1.bf16.xpose.msra.mxu0 0
        %1170 = vmatprep.subr.bf16.mxu0 0
        %1171 = vmatpush1.bf16.xpose.msra.mxu0 0
        %1172 = vmatprep.subr.bf16.mxu0 0
        %1173 = vmatpush1.bf16.xpose.msra.mxu0 0
        %1174 = vmatprep.subr.bf16.mxu0 0
        %1175 = vmatpush1.bf16.xpose.msra.mxu0 0
        %1176 = vmatprep.subr.bf16.mxu0 0
        %1177 = vmatpush1.bf16.xpose.msra.mxu0 0
        %1178 = vmatprep.subr.bf16.mxu0 0
        %1179 = vmatpush1.bf16.xpose.msra.mxu0 0
        %1180 = vmatprep.subr.bf16.mxu0 0
        %1181 = vmatpush1.bf16.xpose.msra.mxu0 0
        %1182 = vmatprep.subr.bf16.mxu0 0
        %1183 = vmatpush1.bf16.xpose.msra.mxu0 0
        %1184 = vmatprep.subr.bf16.mxu0 0
        %1185 = vmatpush1.bf16.xpose.msra.mxu0 0
        %1186 = vmatprep.subr.bf16.mxu0 0
        %1187 = vmatpush1.bf16.xpose.msra.mxu0 0
        %1188 = vmatprep.subr.bf16.mxu0 0
        %1189 = vmatpush1.bf16.xpose.msra.mxu0 0
        %1190 = vmatprep.mubr.bf16.mxu0 0
        %1191 = vmatmul.mubr.bf16.gmra.mrb[0].mxu0 %v1153
        %v1192 = vpop.f32.mrb[0].mxu0
        %v1193 = vadd.f32 %v621, %v1192
        %v1194 = vpop.f32.mrb[0].mxu0
        %v1195 = vpop.f32.mrb[0].mxu0
        %v1196 = vadd.f32 %v622, %v1195
        %v1197 = vpop.f32.mrb[0].mxu0
        %1198 = vdwg.mxu0
        %1200 = vrot.lane.b32.xlu0 %v625, 96
        %v1201 = vpop.permute.xlu0 %1200
        %1203 = vrot.lane.b32.xlu0 %v629, 96
        %v1204 = vpop.permute.xlu0 %1203
        %v1206 = vsel %vm635, %v1201, 0
        %v1209 = vsel %vm635, %v1204, 0
        %1211 = vmatprep.subr.bf16.mxu0 0
        %1212 = vmatpush1.bf16.xpose.msra.mxu0 %v1209
        %1213 = vmatprep.subr.bf16.mxu0 0
        %1214 = vmatpush1.bf16.xpose.msra.mxu0 0
        %1215 = vmatprep.subr.bf16.mxu0 0
        %1216 = vmatpush1.bf16.xpose.msra.mxu0 0
        %1217 = vmatprep.subr.bf16.mxu0 0
        %1218 = vmatpush1.bf16.xpose.msra.mxu0 0
        %1219 = vmatprep.subr.bf16.mxu0 0
        %1220 = vmatpush1.bf16.xpose.msra.mxu0 0
        %1221 = vmatprep.subr.bf16.mxu0 0
        %1222 = vmatpush1.bf16.xpose.msra.mxu0 0
        %1223 = vmatprep.subr.bf16.mxu0 0
        %1224 = vmatpush1.bf16.xpose.msra.mxu0 0
        %1225 = vmatprep.subr.bf16.mxu0 0
        %1226 = vmatpush1.bf16.xpose.msra.mxu0 0
        %1227 = vmatprep.subr.bf16.mxu0 0
        %1228 = vmatpush1.bf16.xpose.msra.mxu0 0
        %1229 = vmatprep.subr.bf16.mxu0 0
        %1230 = vmatpush1.bf16.xpose.msra.mxu0 0
        %1231 = vmatprep.subr.bf16.mxu0 0
        %1232 = vmatpush1.bf16.xpose.msra.mxu0 0
        %1233 = vmatprep.subr.bf16.mxu0 0
        %1234 = vmatpush1.bf16.xpose.msra.mxu0 0
        %1235 = vmatprep.subr.bf16.mxu0 0
        %1236 = vmatpush1.bf16.xpose.msra.mxu0 0
        %1237 = vmatprep.subr.bf16.mxu0 0
        %1238 = vmatpush1.bf16.xpose.msra.mxu0 0
        %1239 = vmatprep.subr.bf16.mxu0 0
        %1240 = vmatpush1.bf16.xpose.msra.mxu0 0
        %1241 = vmatprep.subr.bf16.mxu0 0
        %1242 = vmatpush1.bf16.xpose.msra.mxu0 0
        %1243 = vmatprep.mubr.bf16.mxu0 0
        %1244 = vmatmul.mubr.bf16.gmra.mrb[0].mxu0 %v1206
        %v1245 = vpop.f32.mrb[0].mxu0
        %v1246 = vadd.f32 %v621, %v1245
        %v1247 = vpop.f32.mrb[0].mxu0
        %v1248 = vpop.f32.mrb[0].mxu0
        %v1249 = vadd.f32 %v622, %v1248
        %v1250 = vpop.f32.mrb[0].mxu0
        %1251 = vdwg.mxu0
        %1253 = vrot.lane.b32.xlu0 %v626, 96
        %v1254 = vpop.permute.xlu0 %1253
        %1256 = vrot.lane.b32.xlu0 %v630, 96
        %v1257 = vpop.permute.xlu0 %1256
        %v1259 = vsel %vm635, %v1254, 0
        %v1262 = vsel %vm635, %v1257, 0
        %1264 = vmatprep.subr.bf16.mxu0 0
        %1265 = vmatpush1.bf16.xpose.msra.mxu0 %v1262
        %1266 = vmatprep.subr.bf16.mxu0 0
        %1267 = vmatpush1.bf16.xpose.msra.mxu0 0
        %1268 = vmatprep.subr.bf16.mxu0 0
        %1269 = vmatpush1.bf16.xpose.msra.mxu0 0
        %1270 = vmatprep.subr.bf16.mxu0 0
        %1271 = vmatpush1.bf16.xpose.msra.mxu0 0
        %1272 = vmatprep.subr.bf16.mxu0 0
        %1273 = vmatpush1.bf16.xpose.msra.mxu0 0
        %1274 = vmatprep.subr.bf16.mxu0 0
        %1275 = vmatpush1.bf16.xpose.msra.mxu0 0
        %1276 = vmatprep.subr.bf16.mxu0 0
        %1277 = vmatpush1.bf16.xpose.msra.mxu0 0
        %1278 = vmatprep.subr.bf16.mxu0 0
        %1279 = vmatpush1.bf16.xpose.msra.mxu0 0
        %1280 = vmatprep.subr.bf16.mxu0 0
        %1281 = vmatpush1.bf16.xpose.msra.mxu0 0
        %1282 = vmatprep.subr.bf16.mxu0 0
        %1283 = vmatpush1.bf16.xpose.msra.mxu0 0
        %1284 = vmatprep.subr.bf16.mxu0 0
        %1285 = vmatpush1.bf16.xpose.msra.mxu0 0
        %1286 = vmatprep.subr.bf16.mxu0 0
        %1287 = vmatpush1.bf16.xpose.msra.mxu0 0
        %1288 = vmatprep.subr.bf16.mxu0 0
        %1289 = vmatpush1.bf16.xpose.msra.mxu0 0
        %1290 = vmatprep.subr.bf16.mxu0 0
        %1291 = vmatpush1.bf16.xpose.msra.mxu0 0
        %1292 = vmatprep.subr.bf16.mxu0 0
        %1293 = vmatpush1.bf16.xpose.msra.mxu0 0
        %1294 = vmatprep.subr.bf16.mxu0 0
        %1295 = vmatpush1.bf16.xpose.msra.mxu0 0
        %1296 = vmatprep.mubr.bf16.mxu0 0
        %1297 = vmatmul.mubr.bf16.gmra.mrb[0].mxu0 %v1259
        %v1298 = vpop.f32.mrb[0].mxu0
        %v1299 = vadd.f32 %v621, %v1298
        %v1300 = vpop.f32.mrb[0].mxu0
        %v1301 = vpop.f32.mrb[0].mxu0
        %v1302 = vadd.f32 %v622, %v1301
        %v1303 = vpop.f32.mrb[0].mxu0
        %1304 = vdwg.mxu0
        %v1305 = vsel %vm824, %v1140, -inf
        %1306 = vmax.xlane.f32.xlu0 %v1305
        %v1307 = vpop.xlane.xlu0 %1306
        %v1308 = vsel %vm824, %v1143, -inf
        %1309 = vmax.xlane.f32.xlu0 %v1308
        %v1310 = vpop.xlane.xlu0 %1309
        %v1311 = vsel %vm824, %v1193, -inf
        %1312 = vmax.xlane.f32.xlu0 %v1311
        %v1313 = vpop.xlane.xlu0 %1312
        %v1314 = vsel %vm824, %v1196, -inf
        %1315 = vmax.xlane.f32.xlu0 %v1314
        %v1316 = vpop.xlane.xlu0 %1315
        %v1317 = vsel %vm824, %v1246, -inf
        %1318 = vmax.xlane.f32.xlu0 %v1317
        %v1319 = vpop.xlane.xlu0 %1318
        %v1320 = vsel %vm824, %v1249, -inf
        %1321 = vmax.xlane.f32.xlu0 %v1320
        %v1322 = vpop.xlane.xlu0 %1321
        %v1323 = vsel %vm824, %v1299, -inf
        %1324 = vmax.xlane.f32.xlu0 %v1323
        %v1325 = vpop.xlane.xlu0 %1324
        %v1326 = vsel %vm824, %v1302, -inf
        %1327 = vmax.xlane.f32.xlu0 %v1326
        %v1328 = vpop.xlane.xlu0 %1327
        %v1329 = vsub.f32 %v1140, %v1307
        %v1330 = vsub.f32 %v1143, %v1310
        %v1331 = vsub.f32 %v1193, %v1313
        %v1332 = vsub.f32 %v1196, %v1316
        %v1333 = vsub.f32 %v1246, %v1319
        %v1334 = vsub.f32 %v1249, %v1322
        %v1335 = vsub.f32 %v1299, %v1325
        %v1336 = vsub.f32 %v1302, %v1328
        %v1337 = vmul.f32 %v1329, 1.442695
        %v1338 = vpow.pop %v1337
        %v1339 = vmul.f32 %v1330, 1.442695
        %v1340 = vpow.pop %v1339
        %v1341 = vmul.f32 %v1331, 1.442695
        %v1342 = vpow.pop %v1341
        %v1343 = vmul.f32 %v1332, 1.442695
        %v1344 = vpow.pop %v1343
        %v1345 = vmul.f32 %v1333, 1.442695
        %v1346 = vpow.pop %v1345
        %v1347 = vmul.f32 %v1334, 1.442695
        %v1348 = vpow.pop %v1347
        %v1349 = vmul.f32 %v1335, 1.442695
        %v1350 = vpow.pop %v1349
        %v1351 = vmul.f32 %v1336, 1.442695
        %v1352 = vpow.pop %v1351
        %v1353 = vsel %vm824, %v1338, 0.0
        %1354 = vadd.xlane.f32.xlu0 %v1353
        %v1355 = vpop.xlane.xlu0 %1354
        %v1356 = vsel %vm824, %v1340, 0.0
        %1357 = vadd.xlane.f32.xlu0 %v1356
        %v1358 = vpop.xlane.xlu0 %1357
        %v1359 = vsel %vm824, %v1342, 0.0
        %1360 = vadd.xlane.f32.xlu0 %v1359
        %v1361 = vpop.xlane.xlu0 %1360
        %v1362 = vsel %vm824, %v1344, 0.0
        %1363 = vadd.xlane.f32.xlu0 %v1362
        %v1364 = vpop.xlane.xlu0 %1363
        %v1365 = vsel %vm824, %v1346, 0.0
        %1366 = vadd.xlane.f32.xlu0 %v1365
        %v1367 = vpop.xlane.xlu0 %1366
        %v1368 = vsel %vm824, %v1348, 0.0
        %1369 = vadd.xlane.f32.xlu0 %v1368
        %v1370 = vpop.xlane.xlu0 %1369
        %v1371 = vsel %vm824, %v1350, 0.0
        %1372 = vadd.xlane.f32.xlu0 %v1371
        %v1373 = vpop.xlane.xlu0 %1372
        %v1374 = vsel %vm824, %v1352, 0.0
        %1375 = vadd.xlane.f32.xlu0 %v1374
        %v1376 = vpop.xlane.xlu0 %1375
        %v1377 = vrcp.pop %v1355
        %v1378 = vrcp.pop %v1358
        %v1379 = vrcp.pop %v1361
        %v1380 = vrcp.pop %v1364
        %v1381 = vrcp.pop %v1367
        %v1382 = vrcp.pop %v1370
        %v1383 = vrcp.pop %v1373
        %v1384 = vrcp.pop %v1376
        %v1385 = vmul.f32 %v1338, %v1377
        %v1386 = vmul.f32 %v1340, %v1378
        %v1387 = vmul.f32 %v1342, %v1379
        %v1388 = vmul.f32 %v1344, %v1380
        %v1389 = vmul.f32 %v1346, %v1381
        %v1390 = vmul.f32 %v1348, %v1382
        %v1391 = vmul.f32 %v1350, %v1383
        %v1392 = vmul.f32 %v1352, %v1384
        %v1393 = vpack.c.bf16 %v1386, %v1385
        %v1394 = vpack.c.bf16 %v1388, %v1387
        %v1395 = vpack.c.bf16 %v1390, %v1389
        %v1396 = vpack.c.bf16 %v1392, %v1391
        %1398 = vrot.lane.b32.xlu0 %v631, 96
        %v1399 = vpop.permute.xlu0 %1398
        %v1402 = vsel %vm824, %v1393, 0
        %1404 = vmatprep.subr.bf16.mxu0 0
        %1405 = vmatpush1.bf16.msra.mxu0 %v1399
        %1406 = vmatprep.subr.bf16.mxu0 0
        %1407 = vmatpush1.bf16.msra.mxu0 0
        %1408 = vmatprep.subr.bf16.mxu0 0
        %1409 = vmatpush1.bf16.msra.mxu0 0
        %1410 = vmatprep.subr.bf16.mxu0 0
        %1411 = vmatpush1.bf16.msra.mxu0 0
        %1412 = vmatprep.subr.bf16.mxu0 0
        %1413 = vmatpush1.bf16.msra.mxu0 0
        %1414 = vmatprep.subr.bf16.mxu0 0
        %1415 = vmatpush1.bf16.msra.mxu0 0
        %1416 = vmatprep.subr.bf16.mxu0 0
        %1417 = vmatpush1.bf16.msra.mxu0 0
        %1418 = vmatprep.subr.bf16.mxu0 0
        %1419 = vmatpush1.bf16.msra.mxu0 0
        %1420 = vmatprep.subr.bf16.mxu0 0
        %1421 = vmatpush1.bf16.msra.mxu0 0
        %1422 = vmatprep.subr.bf16.mxu0 0
        %1423 = vmatpush1.bf16.msra.mxu0 0
        %1424 = vmatprep.subr.bf16.mxu0 0
        %1425 = vmatpush1.bf16.msra.mxu0 0
        %1426 = vmatprep.subr.bf16.mxu0 0
        %1427 = vmatpush1.bf16.msra.mxu0 0
        %1428 = vmatprep.subr.bf16.mxu0 0
        %1429 = vmatpush1.bf16.msra.mxu0 0
        %1430 = vmatprep.subr.bf16.mxu0 0
        %1431 = vmatpush1.bf16.msra.mxu0 0
        %1432 = vmatprep.subr.bf16.mxu0 0
        %1433 = vmatpush1.bf16.msra.mxu0 0
        %1434 = vmatprep.subr.bf16.mxu0 0
        %1435 = vmatpush1.bf16.msra.mxu0 0
        %1436 = vmatprep.mubr.bf16.mxu0 0
        %1437 = vmatmul.mubr.bf16.gmra.mrb[0].mxu0 %v1402
        %v1438 = vpop.f32.mrb[0].mxu0
        %v1439 = vadd.f32 0.0, %v1438
        %v1440 = vpop.f32.mrb[0].mxu0
        %v1441 = vpop.f32.mrb[0].mxu0
        %v1442 = vadd.f32 0.0, %v1441
        %v1443 = vpop.f32.mrb[0].mxu0
        %1444 = vdwg.mxu0
        %1446 = vrot.lane.b32.xlu0 %v632, 96
        %v1447 = vpop.permute.xlu0 %1446
        %v1450 = vsel %vm824, %v1394, 0
        %1452 = vmatprep.subr.bf16.mxu0 0
        %1453 = vmatpush1.bf16.msra.mxu0 %v1447
        %1454 = vmatprep.subr.bf16.mxu0 0
        %1455 = vmatpush1.bf16.msra.mxu0 0
        %1456 = vmatprep.subr.bf16.mxu0 0
        %1457 = vmatpush1.bf16.msra.mxu0 0
        %1458 = vmatprep.subr.bf16.mxu0 0
        %1459 = vmatpush1.bf16.msra.mxu0 0
        %1460 = vmatprep.subr.bf16.mxu0 0
        %1461 = vmatpush1.bf16.msra.mxu0 0
        %1462 = vmatprep.subr.bf16.mxu0 0
        %1463 = vmatpush1.bf16.msra.mxu0 0
        %1464 = vmatprep.subr.bf16.mxu0 0
        %1465 = vmatpush1.bf16.msra.mxu0 0
        %1466 = vmatprep.subr.bf16.mxu0 0
        %1467 = vmatpush1.bf16.msra.mxu0 0
        %1468 = vmatprep.subr.bf16.mxu0 0
        %1469 = vmatpush1.bf16.msra.mxu0 0
        %1470 = vmatprep.subr.bf16.mxu0 0
        %1471 = vmatpush1.bf16.msra.mxu0 0
        %1472 = vmatprep.subr.bf16.mxu0 0
        %1473 = vmatpush1.bf16.msra.mxu0 0
        %1474 = vmatprep.subr.bf16.mxu0 0
        %1475 = vmatpush1.bf16.msra.mxu0 0
        %1476 = vmatprep.subr.bf16.mxu0 0
        %1477 = vmatpush1.bf16.msra.mxu0 0
        %1478 = vmatprep.subr.bf16.mxu0 0
        %1479 = vmatpush1.bf16.msra.mxu0 0
        %1480 = vmatprep.subr.bf16.mxu0 0
        %1481 = vmatpush1.bf16.msra.mxu0 0
        %1482 = vmatprep.subr.bf16.mxu0 0
        %1483 = vmatpush1.bf16.msra.mxu0 0
        %1484 = vmatprep.mubr.bf16.mxu0 0
        %1485 = vmatmul.mubr.bf16.gmra.mrb[0].mxu0 %v1450
        %v1486 = vpop.f32.mrb[0].mxu0
        %v1487 = vadd.f32 0.0, %v1486
        %v1488 = vpop.f32.mrb[0].mxu0
        %v1489 = vpop.f32.mrb[0].mxu0
        %v1490 = vadd.f32 0.0, %v1489
        %v1491 = vpop.f32.mrb[0].mxu0
        %1492 = vdwg.mxu0
        %1494 = vrot.lane.b32.xlu0 %v633, 96
        %v1495 = vpop.permute.xlu0 %1494
        %v1498 = vsel %vm824, %v1395, 0
        %1500 = vmatprep.subr.bf16.mxu0 0
        %1501 = vmatpush1.bf16.msra.mxu0 %v1495
        %1502 = vmatprep.subr.bf16.mxu0 0
        %1503 = vmatpush1.bf16.msra.mxu0 0
        %1504 = vmatprep.subr.bf16.mxu0 0
        %1505 = vmatpush1.bf16.msra.mxu0 0
        %1506 = vmatprep.subr.bf16.mxu0 0
        %1507 = vmatpush1.bf16.msra.mxu0 0
        %1508 = vmatprep.subr.bf16.mxu0 0
        %1509 = vmatpush1.bf16.msra.mxu0 0
        %1510 = vmatprep.subr.bf16.mxu0 0
        %1511 = vmatpush1.bf16.msra.mxu0 0
        %1512 = vmatprep.subr.bf16.mxu0 0
        %1513 = vmatpush1.bf16.msra.mxu0 0
        %1514 = vmatprep.subr.bf16.mxu0 0
        %1515 = vmatpush1.bf16.msra.mxu0 0
        %1516 = vmatprep.subr.bf16.mxu0 0
        %1517 = vmatpush1.bf16.msra.mxu0 0
        %1518 = vmatprep.subr.bf16.mxu0 0
        %1519 = vmatpush1.bf16.msra.mxu0 0
        %1520 = vmatprep.subr.bf16.mxu0 0
        %1521 = vmatpush1.bf16.msra.mxu0 0
        %1522 = vmatprep.subr.bf16.mxu0 0
        %1523 = vmatpush1.bf16.msra.mxu0 0
        %1524 = vmatprep.subr.bf16.mxu0 0
        %1525 = vmatpush1.bf16.msra.mxu0 0
        %1526 = vmatprep.subr.bf16.mxu0 0
        %1527 = vmatpush1.bf16.msra.mxu0 0
        %1528 = vmatprep.subr.bf16.mxu0 0
        %1529 = vmatpush1.bf16.msra.mxu0 0
        %1530 = vmatprep.subr.bf16.mxu0 0
        %1531 = vmatpush1.bf16.msra.mxu0 0
        %1532 = vmatprep.mubr.bf16.mxu0 0
        %1533 = vmatmul.mubr.bf16.gmra.mrb[0].mxu0 %v1498
        %v1534 = vpop.f32.mrb[0].mxu0
        %v1535 = vadd.f32 0.0, %v1534
        %v1536 = vpop.f32.mrb[0].mxu0
        %v1537 = vpop.f32.mrb[0].mxu0
        %v1538 = vadd.f32 0.0, %v1537
        %v1539 = vpop.f32.mrb[0].mxu0
        %1540 = vdwg.mxu0
        %1542 = vrot.lane.b32.xlu0 %v634, 96
        %v1543 = vpop.permute.xlu0 %1542
        %v1546 = vsel %vm824, %v1396, 0
        %1548 = vmatprep.subr.bf16.mxu0 0
        %1549 = vmatpush1.bf16.msra.mxu0 %v1543
        %1550 = vmatprep.subr.bf16.mxu0 0
        %1551 = vmatpush1.bf16.msra.mxu0 0
        %1552 = vmatprep.subr.bf16.mxu0 0
        %1553 = vmatpush1.bf16.msra.mxu0 0
        %1554 = vmatprep.subr.bf16.mxu0 0
        %1555 = vmatpush1.bf16.msra.mxu0 0
        %1556 = vmatprep.subr.bf16.mxu0 0
        %1557 = vmatpush1.bf16.msra.mxu0 0
        %1558 = vmatprep.subr.bf16.mxu0 0
        %1559 = vmatpush1.bf16.msra.mxu0 0
        %1560 = vmatprep.subr.bf16.mxu0 0
        %1561 = vmatpush1.bf16.msra.mxu0 0
        %1562 = vmatprep.subr.bf16.mxu0 0
        %1563 = vmatpush1.bf16.msra.mxu0 0
        %1564 = vmatprep.subr.bf16.mxu0 0
        %1565 = vmatpush1.bf16.msra.mxu0 0
        %1566 = vmatprep.subr.bf16.mxu0 0
        %1567 = vmatpush1.bf16.msra.mxu0 0
        %1568 = vmatprep.subr.bf16.mxu0 0
        %1569 = vmatpush1.bf16.msra.mxu0 0
        %1570 = vmatprep.subr.bf16.mxu0 0
        %1571 = vmatpush1.bf16.msra.mxu0 0
        %1572 = vmatprep.subr.bf16.mxu0 0
        %1573 = vmatpush1.bf16.msra.mxu0 0
        %1574 = vmatprep.subr.bf16.mxu0 0
        %1575 = vmatpush1.bf16.msra.mxu0 0
        %1576 = vmatprep.subr.bf16.mxu0 0
        %1577 = vmatpush1.bf16.msra.mxu0 0
        %1578 = vmatprep.subr.bf16.mxu0 0
        %1579 = vmatpush1.bf16.msra.mxu0 0
        %1580 = vmatprep.mubr.bf16.mxu0 0
        %1581 = vmatmul.mubr.bf16.gmra.mrb[0].mxu0 %v1546
        %v1582 = vpop.f32.mrb[0].mxu0
        %v1583 = vadd.f32 0.0, %v1582
        %v1584 = vpop.f32.mrb[0].mxu0
        %v1585 = vpop.f32.mrb[0].mxu0
        %v1586 = vadd.f32 0.0, %v1585
        %v1587 = vpop.f32.mrb[0].mxu0
        %1588 = vdwg.mxu0
        %1589 = vrot.lane.b32.xlu0 %v623, 64
        %v1590 = vpop.permute.xlu0 %1589
        %1591 = vrot.lane.b32.xlu0 %v627, 64
        %v1592 = vpop.permute.xlu0 %1591
        %v1594 = vsel %vm635, %v1590, 0
        %v1597 = vsel %vm635, %v1592, 0
        %1599 = vmatprep.subr.bf16.mxu0 0
        %1600 = vmatpush1.bf16.xpose.msra.mxu0 %v1597
        %1601 = vmatprep.subr.bf16.mxu0 0
        %1602 = vmatpush1.bf16.xpose.msra.mxu0 0
        %1603 = vmatprep.subr.bf16.mxu0 0
        %1604 = vmatpush1.bf16.xpose.msra.mxu0 0
        %1605 = vmatprep.subr.bf16.mxu0 0
        %1606 = vmatpush1.bf16.xpose.msra.mxu0 0
        %1607 = vmatprep.subr.bf16.mxu0 0
        %1608 = vmatpush1.bf16.xpose.msra.mxu0 0
        %1609 = vmatprep.subr.bf16.mxu0 0
        %1610 = vmatpush1.bf16.xpose.msra.mxu0 0
        %1611 = vmatprep.subr.bf16.mxu0 0
        %1612 = vmatpush1.bf16.xpose.msra.mxu0 0
        %1613 = vmatprep.subr.bf16.mxu0 0
        %1614 = vmatpush1.bf16.xpose.msra.mxu0 0
        %1615 = vmatprep.subr.bf16.mxu0 0
        %1616 = vmatpush1.bf16.xpose.msra.mxu0 0
        %1617 = vmatprep.subr.bf16.mxu0 0
        %1618 = vmatpush1.bf16.xpose.msra.mxu0 0
        %1619 = vmatprep.subr.bf16.mxu0 0
        %1620 = vmatpush1.bf16.xpose.msra.mxu0 0
        %1621 = vmatprep.subr.bf16.mxu0 0
        %1622 = vmatpush1.bf16.xpose.msra.mxu0 0
        %1623 = vmatprep.subr.bf16.mxu0 0
        %1624 = vmatpush1.bf16.xpose.msra.mxu0 0
        %1625 = vmatprep.subr.bf16.mxu0 0
        %1626 = vmatpush1.bf16.xpose.msra.mxu0 0
        %1627 = vmatprep.subr.bf16.mxu0 0
        %1628 = vmatpush1.bf16.xpose.msra.mxu0 0
        %1629 = vmatprep.subr.bf16.mxu0 0
        %1630 = vmatpush1.bf16.xpose.msra.mxu0 0
        %1631 = vmatprep.mubr.bf16.mxu0 0
        %1632 = vmatmul.mubr.bf16.gmra.mrb[0].mxu0 %v1594
        %v1633 = vpop.f32.mrb[0].mxu0
        %v1634 = vadd.f32 %v621, %v1633
        %v1635 = vpop.f32.mrb[0].mxu0
        %v1636 = vpop.f32.mrb[0].mxu0
        %v1637 = vadd.f32 %v622, %v1636
        %v1638 = vpop.f32.mrb[0].mxu0
        %1639 = vdwg.mxu0
        %1640 = vrot.lane.b32.xlu0 %v624, 64
        %v1641 = vpop.permute.xlu0 %1640
        %1642 = vrot.lane.b32.xlu0 %v628, 64
        %v1643 = vpop.permute.xlu0 %1642
        %v1645 = vsel %vm635, %v1641, 0
        %v1648 = vsel %vm635, %v1643, 0
        %1650 = vmatprep.subr.bf16.mxu0 0
        %1651 = vmatpush1.bf16.xpose.msra.mxu0 %v1648
        %1652 = vmatprep.subr.bf16.mxu0 0
        %1653 = vmatpush1.bf16.xpose.msra.mxu0 0
        %1654 = vmatprep.subr.bf16.mxu0 0
        %1655 = vmatpush1.bf16.xpose.msra.mxu0 0
        %1656 = vmatprep.subr.bf16.mxu0 0
        %1657 = vmatpush1.bf16.xpose.msra.mxu0 0
        %1658 = vmatprep.subr.bf16.mxu0 0
        %1659 = vmatpush1.bf16.xpose.msra.mxu0 0
        %1660 = vmatprep.subr.bf16.mxu0 0
        %1661 = vmatpush1.bf16.xpose.msra.mxu0 0
        %1662 = vmatprep.subr.bf16.mxu0 0
        %1663 = vmatpush1.bf16.xpose.msra.mxu0 0
        %1664 = vmatprep.subr.bf16.mxu0 0
        %1665 = vmatpush1.bf16.xpose.msra.mxu0 0
        %1666 = vmatprep.subr.bf16.mxu0 0
        %1667 = vmatpush1.bf16.xpose.msra.mxu0 0
        %1668 = vmatprep.subr.bf16.mxu0 0
        %1669 = vmatpush1.bf16.xpose.msra.mxu0 0
        %1670 = vmatprep.subr.bf16.mxu0 0
        %1671 = vmatpush1.bf16.xpose.msra.mxu0 0
        %1672 = vmatprep.subr.bf16.mxu0 0
        %1673 = vmatpush1.bf16.xpose.msra.mxu0 0
        %1674 = vmatprep.subr.bf16.mxu0 0
        %1675 = vmatpush1.bf16.xpose.msra.mxu0 0
        %1676 = vmatprep.subr.bf16.mxu0 0
        %1677 = vmatpush1.bf16.xpose.msra.mxu0 0
        %1678 = vmatprep.subr.bf16.mxu0 0
        %1679 = vmatpush1.bf16.xpose.msra.mxu0 0
        %1680 = vmatprep.subr.bf16.mxu0 0
        %1681 = vmatpush1.bf16.xpose.msra.mxu0 0
        %1682 = vmatprep.mubr.bf16.mxu0 0
        %1683 = vmatmul.mubr.bf16.gmra.mrb[0].mxu0 %v1645
        %v1684 = vpop.f32.mrb[0].mxu0
        %v1685 = vadd.f32 %v621, %v1684
        %v1686 = vpop.f32.mrb[0].mxu0
        %v1687 = vpop.f32.mrb[0].mxu0
        %v1688 = vadd.f32 %v622, %v1687
        %v1689 = vpop.f32.mrb[0].mxu0
        %1690 = vdwg.mxu0
        %1691 = vrot.lane.b32.xlu0 %v625, 64
        %v1692 = vpop.permute.xlu0 %1691
        %1693 = vrot.lane.b32.xlu0 %v629, 64
        %v1694 = vpop.permute.xlu0 %1693
        %v1696 = vsel %vm635, %v1692, 0
        %v1699 = vsel %vm635, %v1694, 0
        %1701 = vmatprep.subr.bf16.mxu0 0
        %1702 = vmatpush1.bf16.xpose.msra.mxu0 %v1699
        %1703 = vmatprep.subr.bf16.mxu0 0
        %1704 = vmatpush1.bf16.xpose.msra.mxu0 0
        %1705 = vmatprep.subr.bf16.mxu0 0
        %1706 = vmatpush1.bf16.xpose.msra.mxu0 0
        %1707 = vmatprep.subr.bf16.mxu0 0
        %1708 = vmatpush1.bf16.xpose.msra.mxu0 0
        %1709 = vmatprep.subr.bf16.mxu0 0
        %1710 = vmatpush1.bf16.xpose.msra.mxu0 0
        %1711 = vmatprep.subr.bf16.mxu0 0
        %1712 = vmatpush1.bf16.xpose.msra.mxu0 0
        %1713 = vmatprep.subr.bf16.mxu0 0
        %1714 = vmatpush1.bf16.xpose.msra.mxu0 0
        %1715 = vmatprep.subr.bf16.mxu0 0
        %1716 = vmatpush1.bf16.xpose.msra.mxu0 0
        %1717 = vmatprep.subr.bf16.mxu0 0
        %1718 = vmatpush1.bf16.xpose.msra.mxu0 0
        %1719 = vmatprep.subr.bf16.mxu0 0
        %1720 = vmatpush1.bf16.xpose.msra.mxu0 0
        %1721 = vmatprep.subr.bf16.mxu0 0
        %1722 = vmatpush1.bf16.xpose.msra.mxu0 0
        %1723 = vmatprep.subr.bf16.mxu0 0
        %1724 = vmatpush1.bf16.xpose.msra.mxu0 0
        %1725 = vmatprep.subr.bf16.mxu0 0
        %1726 = vmatpush1.bf16.xpose.msra.mxu0 0
        %1727 = vmatprep.subr.bf16.mxu0 0
        %1728 = vmatpush1.bf16.xpose.msra.mxu0 0
        %1729 = vmatprep.subr.bf16.mxu0 0
        %1730 = vmatpush1.bf16.xpose.msra.mxu0 0
        %1731 = vmatprep.subr.bf16.mxu0 0
        %1732 = vmatpush1.bf16.xpose.msra.mxu0 0
        %1733 = vmatprep.mubr.bf16.mxu0 0
        %1734 = vmatmul.mubr.bf16.gmra.mrb[0].mxu0 %v1696
        %v1735 = vpop.f32.mrb[0].mxu0
        %v1736 = vadd.f32 %v621, %v1735
        %v1737 = vpop.f32.mrb[0].mxu0
        %v1738 = vpop.f32.mrb[0].mxu0
        %v1739 = vadd.f32 %v622, %v1738
        %v1740 = vpop.f32.mrb[0].mxu0
        %1741 = vdwg.mxu0
        %1742 = vrot.lane.b32.xlu0 %v626, 64
        %v1743 = vpop.permute.xlu0 %1742
        %1744 = vrot.lane.b32.xlu0 %v630, 64
        %v1745 = vpop.permute.xlu0 %1744
        %v1747 = vsel %vm635, %v1743, 0
        %v1750 = vsel %vm635, %v1745, 0
        %1752 = vmatprep.subr.bf16.mxu0 0
        %1753 = vmatpush1.bf16.xpose.msra.mxu0 %v1750
        %1754 = vmatprep.subr.bf16.mxu0 0
        %1755 = vmatpush1.bf16.xpose.msra.mxu0 0
        %1756 = vmatprep.subr.bf16.mxu0 0
        %1757 = vmatpush1.bf16.xpose.msra.mxu0 0
        %1758 = vmatprep.subr.bf16.mxu0 0
        %1759 = vmatpush1.bf16.xpose.msra.mxu0 0
        %1760 = vmatprep.subr.bf16.mxu0 0
        %1761 = vmatpush1.bf16.xpose.msra.mxu0 0
        %1762 = vmatprep.subr.bf16.mxu0 0
        %1763 = vmatpush1.bf16.xpose.msra.mxu0 0
        %1764 = vmatprep.subr.bf16.mxu0 0
        %1765 = vmatpush1.bf16.xpose.msra.mxu0 0
        %1766 = vmatprep.subr.bf16.mxu0 0
        %1767 = vmatpush1.bf16.xpose.msra.mxu0 0
        %1768 = vmatprep.subr.bf16.mxu0 0
        %1769 = vmatpush1.bf16.xpose.msra.mxu0 0
        %1770 = vmatprep.subr.bf16.mxu0 0
        %1771 = vmatpush1.bf16.xpose.msra.mxu0 0
        %1772 = vmatprep.subr.bf16.mxu0 0
        %1773 = vmatpush1.bf16.xpose.msra.mxu0 0
        %1774 = vmatprep.subr.bf16.mxu0 0
        %1775 = vmatpush1.bf16.xpose.msra.mxu0 0
        %1776 = vmatprep.subr.bf16.mxu0 0
        %1777 = vmatpush1.bf16.xpose.msra.mxu0 0
        %1778 = vmatprep.subr.bf16.mxu0 0
        %1779 = vmatpush1.bf16.xpose.msra.mxu0 0
        %1780 = vmatprep.subr.bf16.mxu0 0
        %1781 = vmatpush1.bf16.xpose.msra.mxu0 0
        %1782 = vmatprep.subr.bf16.mxu0 0
        %1783 = vmatpush1.bf16.xpose.msra.mxu0 0
        %1784 = vmatprep.mubr.bf16.mxu0 0
        %1785 = vmatmul.mubr.bf16.gmra.mrb[0].mxu0 %v1747
        %v1786 = vpop.f32.mrb[0].mxu0
        %v1787 = vadd.f32 %v621, %v1786
        %v1788 = vpop.f32.mrb[0].mxu0
        %v1789 = vpop.f32.mrb[0].mxu0
        %v1790 = vadd.f32 %v622, %v1789
        %v1791 = vpop.f32.mrb[0].mxu0
        %1792 = vdwg.mxu0
        %v1793 = vsel %vm824, %v1634, -inf
        %1794 = vmax.xlane.f32.xlu0 %v1793
        %v1795 = vpop.xlane.xlu0 %1794
        %v1796 = vsel %vm824, %v1637, -inf
        %1797 = vmax.xlane.f32.xlu0 %v1796
        %v1798 = vpop.xlane.xlu0 %1797
        %v1799 = vsel %vm824, %v1685, -inf
        %1800 = vmax.xlane.f32.xlu0 %v1799
        %v1801 = vpop.xlane.xlu0 %1800
        %v1802 = vsel %vm824, %v1688, -inf
        %1803 = vmax.xlane.f32.xlu0 %v1802
        %v1804 = vpop.xlane.xlu0 %1803
        %v1805 = vsel %vm824, %v1736, -inf
        %1806 = vmax.xlane.f32.xlu0 %v1805
        %v1807 = vpop.xlane.xlu0 %1806
        %v1808 = vsel %vm824, %v1739, -inf
        %1809 = vmax.xlane.f32.xlu0 %v1808
        %v1810 = vpop.xlane.xlu0 %1809
        %v1811 = vsel %vm824, %v1787, -inf
        %1812 = vmax.xlane.f32.xlu0 %v1811
        %v1813 = vpop.xlane.xlu0 %1812
        %v1814 = vsel %vm824, %v1790, -inf
        %1815 = vmax.xlane.f32.xlu0 %v1814
        %v1816 = vpop.xlane.xlu0 %1815
        %v1817 = vsub.f32 %v1634, %v1795
        %v1818 = vsub.f32 %v1637, %v1798
        %v1819 = vsub.f32 %v1685, %v1801
        %v1820 = vsub.f32 %v1688, %v1804
        %v1821 = vsub.f32 %v1736, %v1807
        %v1822 = vsub.f32 %v1739, %v1810
        %v1823 = vsub.f32 %v1787, %v1813
        %v1824 = vsub.f32 %v1790, %v1816
        %v1825 = vmul.f32 %v1817, 1.442695
        %v1826 = vpow.pop %v1825
        %v1827 = vmul.f32 %v1818, 1.442695
        %v1828 = vpow.pop %v1827
        %v1829 = vmul.f32 %v1819, 1.442695
        %v1830 = vpow.pop %v1829
        %v1831 = vmul.f32 %v1820, 1.442695
        %v1832 = vpow.pop %v1831
        %v1833 = vmul.f32 %v1821, 1.442695
        %v1834 = vpow.pop %v1833
        %v1835 = vmul.f32 %v1822, 1.442695
        %v1836 = vpow.pop %v1835
        %v1837 = vmul.f32 %v1823, 1.442695
        %v1838 = vpow.pop %v1837
        %v1839 = vmul.f32 %v1824, 1.442695
        %v1840 = vpow.pop %v1839
        %v1841 = vsel %vm824, %v1826, 0.0
        %1842 = vadd.xlane.f32.xlu0 %v1841
        %v1843 = vpop.xlane.xlu0 %1842
        %v1844 = vsel %vm824, %v1828, 0.0
        %1845 = vadd.xlane.f32.xlu0 %v1844
        %v1846 = vpop.xlane.xlu0 %1845
        %v1847 = vsel %vm824, %v1830, 0.0
        %1848 = vadd.xlane.f32.xlu0 %v1847
        %v1849 = vpop.xlane.xlu0 %1848
        %v1850 = vsel %vm824, %v1832, 0.0
        %1851 = vadd.xlane.f32.xlu0 %v1850
        %v1852 = vpop.xlane.xlu0 %1851
        %v1853 = vsel %vm824, %v1834, 0.0
        %1854 = vadd.xlane.f32.xlu0 %v1853
        %v1855 = vpop.xlane.xlu0 %1854
        %v1856 = vsel %vm824, %v1836, 0.0
        %1857 = vadd.xlane.f32.xlu0 %v1856
        %v1858 = vpop.xlane.xlu0 %1857
        %v1859 = vsel %vm824, %v1838, 0.0
        %1860 = vadd.xlane.f32.xlu0 %v1859
        %v1861 = vpop.xlane.xlu0 %1860
        %v1862 = vsel %vm824, %v1840, 0.0
        %1863 = vadd.xlane.f32.xlu0 %v1862
        %v1864 = vpop.xlane.xlu0 %1863
        %v1865 = vrcp.pop %v1843
        %v1866 = vrcp.pop %v1846
        %v1867 = vrcp.pop %v1849
        %v1868 = vrcp.pop %v1852
        %v1869 = vrcp.pop %v1855
        %v1870 = vrcp.pop %v1858
        %v1871 = vrcp.pop %v1861
        %v1872 = vrcp.pop %v1864
        %v1873 = vmul.f32 %v1826, %v1865
        %v1874 = vmul.f32 %v1828, %v1866
        %v1875 = vmul.f32 %v1830, %v1867
        %v1876 = vmul.f32 %v1832, %v1868
        %v1877 = vmul.f32 %v1834, %v1869
        %v1878 = vmul.f32 %v1836, %v1870
        %v1879 = vmul.f32 %v1838, %v1871
        %v1880 = vmul.f32 %v1840, %v1872
        %v1881 = vpack.c.bf16 %v1874, %v1873
        %v1882 = vpack.c.bf16 %v1876, %v1875
        %v1883 = vpack.c.bf16 %v1878, %v1877
        %v1884 = vpack.c.bf16 %v1880, %v1879
        %1885 = vrot.lane.b32.xlu0 %v631, 64
        %v1886 = vpop.permute.xlu0 %1885
        %v1889 = vsel %vm824, %v1881, 0
        %1891 = vmatprep.subr.bf16.mxu0 0
        %1892 = vmatpush1.bf16.msra.mxu0 %v1886
        %1893 = vmatprep.subr.bf16.mxu0 0
        %1894 = vmatpush1.bf16.msra.mxu0 0
        %1895 = vmatprep.subr.bf16.mxu0 0
        %1896 = vmatpush1.bf16.msra.mxu0 0
        %1897 = vmatprep.subr.bf16.mxu0 0
        %1898 = vmatpush1.bf16.msra.mxu0 0
        %1899 = vmatprep.subr.bf16.mxu0 0
        %1900 = vmatpush1.bf16.msra.mxu0 0
        %1901 = vmatprep.subr.bf16.mxu0 0
        %1902 = vmatpush1.bf16.msra.mxu0 0
        %1903 = vmatprep.subr.bf16.mxu0 0
        %1904 = vmatpush1.bf16.msra.mxu0 0
        %1905 = vmatprep.subr.bf16.mxu0 0
        %1906 = vmatpush1.bf16.msra.mxu0 0
        %1907 = vmatprep.subr.bf16.mxu0 0
        %1908 = vmatpush1.bf16.msra.mxu0 0
        %1909 = vmatprep.subr.bf16.mxu0 0
        %1910 = vmatpush1.bf16.msra.mxu0 0
        %1911 = vmatprep.subr.bf16.mxu0 0
        %1912 = vmatpush1.bf16.msra.mxu0 0
        %1913 = vmatprep.subr.bf16.mxu0 0
        %1914 = vmatpush1.bf16.msra.mxu0 0
        %1915 = vmatprep.subr.bf16.mxu0 0
        %1916 = vmatpush1.bf16.msra.mxu0 0
        %1917 = vmatprep.subr.bf16.mxu0 0
        %1918 = vmatpush1.bf16.msra.mxu0 0
        %1919 = vmatprep.subr.bf16.mxu0 0
        %1920 = vmatpush1.bf16.msra.mxu0 0
        %1921 = vmatprep.subr.bf16.mxu0 0
        %1922 = vmatpush1.bf16.msra.mxu0 0
        %1923 = vmatprep.mubr.bf16.mxu0 0
        %1924 = vmatmul.mubr.bf16.gmra.mrb[0].mxu0 %v1889
        %v1925 = vpop.f32.mrb[0].mxu0
        %v1926 = vadd.f32 0.0, %v1925
        %v1927 = vpop.f32.mrb[0].mxu0
        %v1928 = vpop.f32.mrb[0].mxu0
        %v1929 = vadd.f32 0.0, %v1928
        %v1930 = vpop.f32.mrb[0].mxu0
        %1931 = vdwg.mxu0
        %1932 = vrot.lane.b32.xlu0 %v632, 64
        %v1933 = vpop.permute.xlu0 %1932
        %v1936 = vsel %vm824, %v1882, 0
        %1938 = vmatprep.subr.bf16.mxu0 0
        %1939 = vmatpush1.bf16.msra.mxu0 %v1933
        %1940 = vmatprep.subr.bf16.mxu0 0
        %1941 = vmatpush1.bf16.msra.mxu0 0
        %1942 = vmatprep.subr.bf16.mxu0 0
        %1943 = vmatpush1.bf16.msra.mxu0 0
        %1944 = vmatprep.subr.bf16.mxu0 0
        %1945 = vmatpush1.bf16.msra.mxu0 0
        %1946 = vmatprep.subr.bf16.mxu0 0
        %1947 = vmatpush1.bf16.msra.mxu0 0
        %1948 = vmatprep.subr.bf16.mxu0 0
        %1949 = vmatpush1.bf16.msra.mxu0 0
        %1950 = vmatprep.subr.bf16.mxu0 0
        %1951 = vmatpush1.bf16.msra.mxu0 0
        %1952 = vmatprep.subr.bf16.mxu0 0
        %1953 = vmatpush1.bf16.msra.mxu0 0
        %1954 = vmatprep.subr.bf16.mxu0 0
        %1955 = vmatpush1.bf16.msra.mxu0 0
        %1956 = vmatprep.subr.bf16.mxu0 0
        %1957 = vmatpush1.bf16.msra.mxu0 0
        %1958 = vmatprep.subr.bf16.mxu0 0
        %1959 = vmatpush1.bf16.msra.mxu0 0
        %1960 = vmatprep.subr.bf16.mxu0 0
        %1961 = vmatpush1.bf16.msra.mxu0 0
        %1962 = vmatprep.subr.bf16.mxu0 0
        %1963 = vmatpush1.bf16.msra.mxu0 0
        %1964 = vmatprep.subr.bf16.mxu0 0
        %1965 = vmatpush1.bf16.msra.mxu0 0
        %1966 = vmatprep.subr.bf16.mxu0 0
        %1967 = vmatpush1.bf16.msra.mxu0 0
        %1968 = vmatprep.subr.bf16.mxu0 0
        %1969 = vmatpush1.bf16.msra.mxu0 0
        %1970 = vmatprep.mubr.bf16.mxu0 0
        %1971 = vmatmul.mubr.bf16.gmra.mrb[0].mxu0 %v1936
        %v1972 = vpop.f32.mrb[0].mxu0
        %v1973 = vadd.f32 0.0, %v1972
        %v1974 = vpop.f32.mrb[0].mxu0
        %v1975 = vpop.f32.mrb[0].mxu0
        %v1976 = vadd.f32 0.0, %v1975
        %v1977 = vpop.f32.mrb[0].mxu0
        %1978 = vdwg.mxu0
        %1979 = vrot.lane.b32.xlu0 %v633, 64
        %v1980 = vpop.permute.xlu0 %1979
        %v1983 = vsel %vm824, %v1883, 0
        %1985 = vmatprep.subr.bf16.mxu0 0
        %1986 = vmatpush1.bf16.msra.mxu0 %v1980
        %1987 = vmatprep.subr.bf16.mxu0 0
        %1988 = vmatpush1.bf16.msra.mxu0 0
        %1989 = vmatprep.subr.bf16.mxu0 0
        %1990 = vmatpush1.bf16.msra.mxu0 0
        %1991 = vmatprep.subr.bf16.mxu0 0
        %1992 = vmatpush1.bf16.msra.mxu0 0
        %1993 = vmatprep.subr.bf16.mxu0 0
        %1994 = vmatpush1.bf16.msra.mxu0 0
        %1995 = vmatprep.subr.bf16.mxu0 0
        %1996 = vmatpush1.bf16.msra.mxu0 0
        %1997 = vmatprep.subr.bf16.mxu0 0
        %1998 = vmatpush1.bf16.msra.mxu0 0
        %1999 = vmatprep.subr.bf16.mxu0 0
        %2000 = vmatpush1.bf16.msra.mxu0 0
        %2001 = vmatprep.subr.bf16.mxu0 0
        %2002 = vmatpush1.bf16.msra.mxu0 0
        %2003 = vmatprep.subr.bf16.mxu0 0
        %2004 = vmatpush1.bf16.msra.mxu0 0
        %2005 = vmatprep.subr.bf16.mxu0 0
        %2006 = vmatpush1.bf16.msra.mxu0 0
        %2007 = vmatprep.subr.bf16.mxu0 0
        %2008 = vmatpush1.bf16.msra.mxu0 0
        %2009 = vmatprep.subr.bf16.mxu0 0
        %2010 = vmatpush1.bf16.msra.mxu0 0
        %2011 = vmatprep.subr.bf16.mxu0 0
        %2012 = vmatpush1.bf16.msra.mxu0 0
        %2013 = vmatprep.subr.bf16.mxu0 0
        %2014 = vmatpush1.bf16.msra.mxu0 0
        %2015 = vmatprep.subr.bf16.mxu0 0
        %2016 = vmatpush1.bf16.msra.mxu0 0
        %2017 = vmatprep.mubr.bf16.mxu0 0
        %2018 = vmatmul.mubr.bf16.gmra.mrb[0].mxu0 %v1983
        %v2019 = vpop.f32.mrb[0].mxu0
        %v2020 = vadd.f32 0.0, %v2019
        %v2021 = vpop.f32.mrb[0].mxu0
        %v2022 = vpop.f32.mrb[0].mxu0
        %v2023 = vadd.f32 0.0, %v2022
        %v2024 = vpop.f32.mrb[0].mxu0
        %2025 = vdwg.mxu0
        %2026 = vrot.lane.b32.xlu0 %v634, 64
        %v2027 = vpop.permute.xlu0 %2026
        %v2030 = vsel %vm824, %v1884, 0
        %2032 = vmatprep.subr.bf16.mxu0 0
        %2033 = vmatpush1.bf16.msra.mxu0 %v2027
        %2034 = vmatprep.subr.bf16.mxu0 0
        %2035 = vmatpush1.bf16.msra.mxu0 0
        %2036 = vmatprep.subr.bf16.mxu0 0
        %2037 = vmatpush1.bf16.msra.mxu0 0
        %2038 = vmatprep.subr.bf16.mxu0 0
        %2039 = vmatpush1.bf16.msra.mxu0 0
        %2040 = vmatprep.subr.bf16.mxu0 0
        %2041 = vmatpush1.bf16.msra.mxu0 0
        %2042 = vmatprep.subr.bf16.mxu0 0
        %2043 = vmatpush1.bf16.msra.mxu0 0
        %2044 = vmatprep.subr.bf16.mxu0 0
        %2045 = vmatpush1.bf16.msra.mxu0 0
        %2046 = vmatprep.subr.bf16.mxu0 0
        %2047 = vmatpush1.bf16.msra.mxu0 0
        %2048 = vmatprep.subr.bf16.mxu0 0
        %2049 = vmatpush1.bf16.msra.mxu0 0
        %2050 = vmatprep.subr.bf16.mxu0 0
        %2051 = vmatpush1.bf16.msra.mxu0 0
        %2052 = vmatprep.subr.bf16.mxu0 0
        %2053 = vmatpush1.bf16.msra.mxu0 0
        %2054 = vmatprep.subr.bf16.mxu0 0
        %2055 = vmatpush1.bf16.msra.mxu0 0
        %2056 = vmatprep.subr.bf16.mxu0 0
        %2057 = vmatpush1.bf16.msra.mxu0 0
        %2058 = vmatprep.subr.bf16.mxu0 0
        %2059 = vmatpush1.bf16.msra.mxu0 0
        %2060 = vmatprep.subr.bf16.mxu0 0
        %2061 = vmatpush1.bf16.msra.mxu0 0
        %2062 = vmatprep.subr.bf16.mxu0 0
        %2063 = vmatpush1.bf16.msra.mxu0 0
        %2064 = vmatprep.mubr.bf16.mxu0 0
        %2065 = vmatmul.mubr.bf16.gmra.mrb[0].mxu0 %v2030
        %v2066 = vpop.f32.mrb[0].mxu0
        %v2067 = vadd.f32 0.0, %v2066
        %v2068 = vpop.f32.mrb[0].mxu0
        %v2069 = vpop.f32.mrb[0].mxu0
        %v2070 = vadd.f32 0.0, %v2069
        %v2071 = vpop.f32.mrb[0].mxu0
        %2072 = vdwg.mxu0
        %2073 = vrot.lane.b32.xlu0 %v623, 32
        %v2074 = vpop.permute.xlu0 %2073
        %2075 = vrot.lane.b32.xlu0 %v627, 32
        %v2076 = vpop.permute.xlu0 %2075
        %v2078 = vsel %vm635, %v2074, 0
        %v2081 = vsel %vm635, %v2076, 0
        %2083 = vmatprep.subr.bf16.mxu0 0
        %2084 = vmatpush1.bf16.xpose.msra.mxu0 %v2081
        %2085 = vmatprep.subr.bf16.mxu0 0
        %2086 = vmatpush1.bf16.xpose.msra.mxu0 0
        %2087 = vmatprep.subr.bf16.mxu0 0
        %2088 = vmatpush1.bf16.xpose.msra.mxu0 0
        %2089 = vmatprep.subr.bf16.mxu0 0
        %2090 = vmatpush1.bf16.xpose.msra.mxu0 0
        %2091 = vmatprep.subr.bf16.mxu0 0
        %2092 = vmatpush1.bf16.xpose.msra.mxu0 0
        %2093 = vmatprep.subr.bf16.mxu0 0
        %2094 = vmatpush1.bf16.xpose.msra.mxu0 0
        %2095 = vmatprep.subr.bf16.mxu0 0
        %2096 = vmatpush1.bf16.xpose.msra.mxu0 0
        %2097 = vmatprep.subr.bf16.mxu0 0
        %2098 = vmatpush1.bf16.xpose.msra.mxu0 0
        %2099 = vmatprep.subr.bf16.mxu0 0
        %2100 = vmatpush1.bf16.xpose.msra.mxu0 0
        %2101 = vmatprep.subr.bf16.mxu0 0
        %2102 = vmatpush1.bf16.xpose.msra.mxu0 0
        %2103 = vmatprep.subr.bf16.mxu0 0
        %2104 = vmatpush1.bf16.xpose.msra.mxu0 0
        %2105 = vmatprep.subr.bf16.mxu0 0
        %2106 = vmatpush1.bf16.xpose.msra.mxu0 0
        %2107 = vmatprep.subr.bf16.mxu0 0
        %2108 = vmatpush1.bf16.xpose.msra.mxu0 0
        %2109 = vmatprep.subr.bf16.mxu0 0
        %2110 = vmatpush1.bf16.xpose.msra.mxu0 0
        %2111 = vmatprep.subr.bf16.mxu0 0
        %2112 = vmatpush1.bf16.xpose.msra.mxu0 0
        %2113 = vmatprep.subr.bf16.mxu0 0
        %2114 = vmatpush1.bf16.xpose.msra.mxu0 0
        %2115 = vmatprep.mubr.bf16.mxu0 0
        %2116 = vmatmul.mubr.bf16.gmra.mrb[0].mxu0 %v2078
        %v2117 = vpop.f32.mrb[0].mxu0
        %v2118 = vadd.f32 %v621, %v2117
        %v2119 = vpop.f32.mrb[0].mxu0
        %v2120 = vpop.f32.mrb[0].mxu0
        %v2121 = vadd.f32 %v622, %v2120
        %v2122 = vpop.f32.mrb[0].mxu0
        %2123 = vdwg.mxu0
        %2124 = vrot.lane.b32.xlu0 %v624, 32
        %v2125 = vpop.permute.xlu0 %2124
        %2126 = vrot.lane.b32.xlu0 %v628, 32
        %v2127 = vpop.permute.xlu0 %2126
        %v2129 = vsel %vm635, %v2125, 0
        %v2132 = vsel %vm635, %v2127, 0
        %2134 = vmatprep.subr.bf16.mxu0 0
        %2135 = vmatpush1.bf16.xpose.msra.mxu0 %v2132
        %2136 = vmatprep.subr.bf16.mxu0 0
        %2137 = vmatpush1.bf16.xpose.msra.mxu0 0
        %2138 = vmatprep.subr.bf16.mxu0 0
        %2139 = vmatpush1.bf16.xpose.msra.mxu0 0
        %2140 = vmatprep.subr.bf16.mxu0 0
        %2141 = vmatpush1.bf16.xpose.msra.mxu0 0
        %2142 = vmatprep.subr.bf16.mxu0 0
        %2143 = vmatpush1.bf16.xpose.msra.mxu0 0
        %2144 = vmatprep.subr.bf16.mxu0 0
        %2145 = vmatpush1.bf16.xpose.msra.mxu0 0
        %2146 = vmatprep.subr.bf16.mxu0 0
        %2147 = vmatpush1.bf16.xpose.msra.mxu0 0
        %2148 = vmatprep.subr.bf16.mxu0 0
        %2149 = vmatpush1.bf16.xpose.msra.mxu0 0
        %2150 = vmatprep.subr.bf16.mxu0 0
        %2151 = vmatpush1.bf16.xpose.msra.mxu0 0
        %2152 = vmatprep.subr.bf16.mxu0 0
        %2153 = vmatpush1.bf16.xpose.msra.mxu0 0
        %2154 = vmatprep.subr.bf16.mxu0 0
        %2155 = vmatpush1.bf16.xpose.msra.mxu0 0
        %2156 = vmatprep.subr.bf16.mxu0 0
        %2157 = vmatpush1.bf16.xpose.msra.mxu0 0
        %2158 = vmatprep.subr.bf16.mxu0 0
        %2159 = vmatpush1.bf16.xpose.msra.mxu0 0
        %2160 = vmatprep.subr.bf16.mxu0 0
        %2161 = vmatpush1.bf16.xpose.msra.mxu0 0
        %2162 = vmatprep.subr.bf16.mxu0 0
        %2163 = vmatpush1.bf16.xpose.msra.mxu0 0
        %2164 = vmatprep.subr.bf16.mxu0 0
        %2165 = vmatpush1.bf16.xpose.msra.mxu0 0
        %2166 = vmatprep.mubr.bf16.mxu0 0
        %2167 = vmatmul.mubr.bf16.gmra.mrb[0].mxu0 %v2129
        %v2168 = vpop.f32.mrb[0].mxu0
        %v2169 = vadd.f32 %v621, %v2168
        %v2170 = vpop.f32.mrb[0].mxu0
        %v2171 = vpop.f32.mrb[0].mxu0
        %v2172 = vadd.f32 %v622, %v2171
        %v2173 = vpop.f32.mrb[0].mxu0
        %2174 = vdwg.mxu0
        %2175 = vrot.lane.b32.xlu0 %v625, 32
        %v2176 = vpop.permute.xlu0 %2175
        %2177 = vrot.lane.b32.xlu0 %v629, 32
        %v2178 = vpop.permute.xlu0 %2177
        %v2180 = vsel %vm635, %v2176, 0
        %v2183 = vsel %vm635, %v2178, 0
        %2185 = vmatprep.subr.bf16.mxu0 0
        %2186 = vmatpush1.bf16.xpose.msra.mxu0 %v2183
        %2187 = vmatprep.subr.bf16.mxu0 0
        %2188 = vmatpush1.bf16.xpose.msra.mxu0 0
        %2189 = vmatprep.subr.bf16.mxu0 0
        %2190 = vmatpush1.bf16.xpose.msra.mxu0 0
        %2191 = vmatprep.subr.bf16.mxu0 0
        %2192 = vmatpush1.bf16.xpose.msra.mxu0 0
        %2193 = vmatprep.subr.bf16.mxu0 0
        %2194 = vmatpush1.bf16.xpose.msra.mxu0 0
        %2195 = vmatprep.subr.bf16.mxu0 0
        %2196 = vmatpush1.bf16.xpose.msra.mxu0 0
        %2197 = vmatprep.subr.bf16.mxu0 0
        %2198 = vmatpush1.bf16.xpose.msra.mxu0 0
        %2199 = vmatprep.subr.bf16.mxu0 0
        %2200 = vmatpush1.bf16.xpose.msra.mxu0 0
        %2201 = vmatprep.subr.bf16.mxu0 0
        %2202 = vmatpush1.bf16.xpose.msra.mxu0 0
        %2203 = vmatprep.subr.bf16.mxu0 0
        %2204 = vmatpush1.bf16.xpose.msra.mxu0 0
        %2205 = vmatprep.subr.bf16.mxu0 0
        %2206 = vmatpush1.bf16.xpose.msra.mxu0 0
        %2207 = vmatprep.subr.bf16.mxu0 0
        %2208 = vmatpush1.bf16.xpose.msra.mxu0 0
        %2209 = vmatprep.subr.bf16.mxu0 0
        %2210 = vmatpush1.bf16.xpose.msra.mxu0 0
        %2211 = vmatprep.subr.bf16.mxu0 0
        %2212 = vmatpush1.bf16.xpose.msra.mxu0 0
        %2213 = vmatprep.subr.bf16.mxu0 0
        %2214 = vmatpush1.bf16.xpose.msra.mxu0 0
        %2215 = vmatprep.subr.bf16.mxu0 0
        %2216 = vmatpush1.bf16.xpose.msra.mxu0 0
        %2217 = vmatprep.mubr.bf16.mxu0 0
        %2218 = vmatmul.mubr.bf16.gmra.mrb[0].mxu0 %v2180
        %v2219 = vpop.f32.mrb[0].mxu0
        %v2220 = vadd.f32 %v621, %v2219
        %v2221 = vpop.f32.mrb[0].mxu0
        %v2222 = vpop.f32.mrb[0].mxu0
        %v2223 = vadd.f32 %v622, %v2222
        %v2224 = vpop.f32.mrb[0].mxu0
        %2225 = vdwg.mxu0
        %2226 = vrot.lane.b32.xlu0 %v626, 32
        %v2227 = vpop.permute.xlu0 %2226
        %2228 = vrot.lane.b32.xlu0 %v630, 32
        %v2229 = vpop.permute.xlu0 %2228
        %v2231 = vsel %vm635, %v2227, 0
        %v2234 = vsel %vm635, %v2229, 0
        %2236 = vmatprep.subr.bf16.mxu0 0
        %2237 = vmatpush1.bf16.xpose.msra.mxu0 %v2234
        %2238 = vmatprep.subr.bf16.mxu0 0
        %2239 = vmatpush1.bf16.xpose.msra.mxu0 0
        %2240 = vmatprep.subr.bf16.mxu0 0
        %2241 = vmatpush1.bf16.xpose.msra.mxu0 0
        %2242 = vmatprep.subr.bf16.mxu0 0
        %2243 = vmatpush1.bf16.xpose.msra.mxu0 0
        %2244 = vmatprep.subr.bf16.mxu0 0
        %2245 = vmatpush1.bf16.xpose.msra.mxu0 0
        %2246 = vmatprep.subr.bf16.mxu0 0
        %2247 = vmatpush1.bf16.xpose.msra.mxu0 0
        %2248 = vmatprep.subr.bf16.mxu0 0
        %2249 = vmatpush1.bf16.xpose.msra.mxu0 0
        %2250 = vmatprep.subr.bf16.mxu0 0
        %2251 = vmatpush1.bf16.xpose.msra.mxu0 0
        %2252 = vmatprep.subr.bf16.mxu0 0
        %2253 = vmatpush1.bf16.xpose.msra.mxu0 0
        %2254 = vmatprep.subr.bf16.mxu0 0
        %2255 = vmatpush1.bf16.xpose.msra.mxu0 0
        %2256 = vmatprep.subr.bf16.mxu0 0
        %2257 = vmatpush1.bf16.xpose.msra.mxu0 0
        %2258 = vmatprep.subr.bf16.mxu0 0
        %2259 = vmatpush1.bf16.xpose.msra.mxu0 0
        %2260 = vmatprep.subr.bf16.mxu0 0
        %2261 = vmatpush1.bf16.xpose.msra.mxu0 0
        %2262 = vmatprep.subr.bf16.mxu0 0
        %2263 = vmatpush1.bf16.xpose.msra.mxu0 0
        %2264 = vmatprep.subr.bf16.mxu0 0
        %2265 = vmatpush1.bf16.xpose.msra.mxu0 0
        %2266 = vmatprep.subr.bf16.mxu0 0
        %2267 = vmatpush1.bf16.xpose.msra.mxu0 0
        %2268 = vmatprep.mubr.bf16.mxu0 0
        %2269 = vmatmul.mubr.bf16.gmra.mrb[0].mxu0 %v2231
        %v2270 = vpop.f32.mrb[0].mxu0
        %v2271 = vadd.f32 %v621, %v2270
        %v2272 = vpop.f32.mrb[0].mxu0
        %v2273 = vpop.f32.mrb[0].mxu0
        %v2274 = vadd.f32 %v622, %v2273
        %v2275 = vpop.f32.mrb[0].mxu0
        %2276 = vdwg.mxu0
        %v2277 = vsel %vm824, %v2118, -inf
        %2278 = vmax.xlane.f32.xlu0 %v2277
        %v2279 = vpop.xlane.xlu0 %2278
        %v2280 = vsel %vm824, %v2121, -inf
        %2281 = vmax.xlane.f32.xlu0 %v2280
        %v2282 = vpop.xlane.xlu0 %2281
        %v2283 = vsel %vm824, %v2169, -inf
        %2284 = vmax.xlane.f32.xlu0 %v2283
        %v2285 = vpop.xlane.xlu0 %2284
        %v2286 = vsel %vm824, %v2172, -inf
        %2287 = vmax.xlane.f32.xlu0 %v2286
        %v2288 = vpop.xlane.xlu0 %2287
        %v2289 = vsel %vm824, %v2220, -inf
        %2290 = vmax.xlane.f32.xlu0 %v2289
        %v2291 = vpop.xlane.xlu0 %2290
        %v2292 = vsel %vm824, %v2223, -inf
        %2293 = vmax.xlane.f32.xlu0 %v2292
        %v2294 = vpop.xlane.xlu0 %2293
        %v2295 = vsel %vm824, %v2271, -inf
        %2296 = vmax.xlane.f32.xlu0 %v2295
        %v2297 = vpop.xlane.xlu0 %2296
        %v2298 = vsel %vm824, %v2274, -inf
        %2299 = vmax.xlane.f32.xlu0 %v2298
        %v2300 = vpop.xlane.xlu0 %2299
        %v2301 = vsub.f32 %v2118, %v2279
        %v2302 = vsub.f32 %v2121, %v2282
        %v2303 = vsub.f32 %v2169, %v2285
        %v2304 = vsub.f32 %v2172, %v2288
        %v2305 = vsub.f32 %v2220, %v2291
        %v2306 = vsub.f32 %v2223, %v2294
        %v2307 = vsub.f32 %v2271, %v2297
        %v2308 = vsub.f32 %v2274, %v2300
        %v2309 = vmul.f32 %v2301, 1.442695
        %v2310 = vpow.pop %v2309
        %v2311 = vmul.f32 %v2302, 1.442695
        %v2312 = vpow.pop %v2311
        %v2313 = vmul.f32 %v2303, 1.442695
        %v2314 = vpow.pop %v2313
        %v2315 = vmul.f32 %v2304, 1.442695
        %v2316 = vpow.pop %v2315
        %v2317 = vmul.f32 %v2305, 1.442695
        %v2318 = vpow.pop %v2317
        %v2319 = vmul.f32 %v2306, 1.442695
        %v2320 = vpow.pop %v2319
        %v2321 = vmul.f32 %v2307, 1.442695
        %v2322 = vpow.pop %v2321
        %v2323 = vmul.f32 %v2308, 1.442695
        %v2324 = vpow.pop %v2323
        %v2325 = vsel %vm824, %v2310, 0.0
        %2326 = vadd.xlane.f32.xlu0 %v2325
        %v2327 = vpop.xlane.xlu0 %2326
        %v2328 = vsel %vm824, %v2312, 0.0
        %2329 = vadd.xlane.f32.xlu0 %v2328
        %v2330 = vpop.xlane.xlu0 %2329
        %v2331 = vsel %vm824, %v2314, 0.0
        %2332 = vadd.xlane.f32.xlu0 %v2331
        %v2333 = vpop.xlane.xlu0 %2332
        %v2334 = vsel %vm824, %v2316, 0.0
        %2335 = vadd.xlane.f32.xlu0 %v2334
        %v2336 = vpop.xlane.xlu0 %2335
        %v2337 = vsel %vm824, %v2318, 0.0
        %2338 = vadd.xlane.f32.xlu0 %v2337
        %v2339 = vpop.xlane.xlu0 %2338
        %v2340 = vsel %vm824, %v2320, 0.0
        %2341 = vadd.xlane.f32.xlu0 %v2340
        %v2342 = vpop.xlane.xlu0 %2341
        %v2343 = vsel %vm824, %v2322, 0.0
        %2344 = vadd.xlane.f32.xlu0 %v2343
        %v2345 = vpop.xlane.xlu0 %2344
        %v2346 = vsel %vm824, %v2324, 0.0
        %2347 = vadd.xlane.f32.xlu0 %v2346
        %v2348 = vpop.xlane.xlu0 %2347
        %v2349 = vrcp.pop %v2327
        %v2350 = vrcp.pop %v2330
        %v2351 = vrcp.pop %v2333
        %v2352 = vrcp.pop %v2336
        %v2353 = vrcp.pop %v2339
        %v2354 = vrcp.pop %v2342
        %v2355 = vrcp.pop %v2345
        %v2356 = vrcp.pop %v2348
        %v2357 = vmul.f32 %v2310, %v2349
        %v2358 = vmul.f32 %v2312, %v2350
        %v2359 = vmul.f32 %v2314, %v2351
        %v2360 = vmul.f32 %v2316, %v2352
        %v2361 = vmul.f32 %v2318, %v2353
        %v2362 = vmul.f32 %v2320, %v2354
        %v2363 = vmul.f32 %v2322, %v2355
        %v2364 = vmul.f32 %v2324, %v2356
        %v2365 = vpack.c.bf16 %v2358, %v2357
        %v2366 = vpack.c.bf16 %v2360, %v2359
        %v2367 = vpack.c.bf16 %v2362, %v2361
        %v2368 = vpack.c.bf16 %v2364, %v2363
        %2369 = vrot.lane.b32.xlu0 %v631, 32
        %v2370 = vpop.permute.xlu0 %2369
        %v2373 = vsel %vm824, %v2365, 0
        %2375 = vmatprep.subr.bf16.mxu0 0
        %2376 = vmatpush1.bf16.msra.mxu0 %v2370
        %2377 = vmatprep.subr.bf16.mxu0 0
        %2378 = vmatpush1.bf16.msra.mxu0 0
        %2379 = vmatprep.subr.bf16.mxu0 0
        %2380 = vmatpush1.bf16.msra.mxu0 0
        %2381 = vmatprep.subr.bf16.mxu0 0
        %2382 = vmatpush1.bf16.msra.mxu0 0
        %2383 = vmatprep.subr.bf16.mxu0 0
        %2384 = vmatpush1.bf16.msra.mxu0 0
        %2385 = vmatprep.subr.bf16.mxu0 0
        %2386 = vmatpush1.bf16.msra.mxu0 0
        %2387 = vmatprep.subr.bf16.mxu0 0
        %2388 = vmatpush1.bf16.msra.mxu0 0
        %2389 = vmatprep.subr.bf16.mxu0 0
        %2390 = vmatpush1.bf16.msra.mxu0 0
        %2391 = vmatprep.subr.bf16.mxu0 0
        %2392 = vmatpush1.bf16.msra.mxu0 0
        %2393 = vmatprep.subr.bf16.mxu0 0
        %2394 = vmatpush1.bf16.msra.mxu0 0
        %2395 = vmatprep.subr.bf16.mxu0 0
        %2396 = vmatpush1.bf16.msra.mxu0 0
        %2397 = vmatprep.subr.bf16.mxu0 0
        %2398 = vmatpush1.bf16.msra.mxu0 0
        %2399 = vmatprep.subr.bf16.mxu0 0
        %2400 = vmatpush1.bf16.msra.mxu0 0
        %2401 = vmatprep.subr.bf16.mxu0 0
        %2402 = vmatpush1.bf16.msra.mxu0 0
        %2403 = vmatprep.subr.bf16.mxu0 0
        %2404 = vmatpush1.bf16.msra.mxu0 0
        %2405 = vmatprep.subr.bf16.mxu0 0
        %2406 = vmatpush1.bf16.msra.mxu0 0
        %2407 = vmatprep.mubr.bf16.mxu0 0
        %2408 = vmatmul.mubr.bf16.gmra.mrb[0].mxu0 %v2373
        %v2409 = vpop.f32.mrb[0].mxu0
        %v2410 = vadd.f32 0.0, %v2409
        %v2411 = vpop.f32.mrb[0].mxu0
        %v2412 = vpop.f32.mrb[0].mxu0
        %v2413 = vadd.f32 0.0, %v2412
        %v2414 = vpop.f32.mrb[0].mxu0
        %2415 = vdwg.mxu0
        %2416 = vrot.lane.b32.xlu0 %v632, 32
        %v2417 = vpop.permute.xlu0 %2416
        %v2420 = vsel %vm824, %v2366, 0
        %2422 = vmatprep.subr.bf16.mxu0 0
        %2423 = vmatpush1.bf16.msra.mxu0 %v2417
        %2424 = vmatprep.subr.bf16.mxu0 0
        %2425 = vmatpush1.bf16.msra.mxu0 0
        %2426 = vmatprep.subr.bf16.mxu0 0
        %2427 = vmatpush1.bf16.msra.mxu0 0
        %2428 = vmatprep.subr.bf16.mxu0 0
        %2429 = vmatpush1.bf16.msra.mxu0 0
        %2430 = vmatprep.subr.bf16.mxu0 0
        %2431 = vmatpush1.bf16.msra.mxu0 0
        %2432 = vmatprep.subr.bf16.mxu0 0
        %2433 = vmatpush1.bf16.msra.mxu0 0
        %2434 = vmatprep.subr.bf16.mxu0 0
        %2435 = vmatpush1.bf16.msra.mxu0 0
        %2436 = vmatprep.subr.bf16.mxu0 0
        %2437 = vmatpush1.bf16.msra.mxu0 0
        %2438 = vmatprep.subr.bf16.mxu0 0
        %2439 = vmatpush1.bf16.msra.mxu0 0
        %2440 = vmatprep.subr.bf16.mxu0 0
        %2441 = vmatpush1.bf16.msra.mxu0 0
        %2442 = vmatprep.subr.bf16.mxu0 0
        %2443 = vmatpush1.bf16.msra.mxu0 0
        %2444 = vmatprep.subr.bf16.mxu0 0
        %2445 = vmatpush1.bf16.msra.mxu0 0
        %2446 = vmatprep.subr.bf16.mxu0 0
        %2447 = vmatpush1.bf16.msra.mxu0 0
        %2448 = vmatprep.subr.bf16.mxu0 0
        %2449 = vmatpush1.bf16.msra.mxu0 0
        %2450 = vmatprep.subr.bf16.mxu0 0
        %2451 = vmatpush1.bf16.msra.mxu0 0
        %2452 = vmatprep.subr.bf16.mxu0 0
        %2453 = vmatpush1.bf16.msra.mxu0 0
        %2454 = vmatprep.mubr.bf16.mxu0 0
        %2455 = vmatmul.mubr.bf16.gmra.mrb[0].mxu0 %v2420
        %v2456 = vpop.f32.mrb[0].mxu0
        %v2457 = vadd.f32 0.0, %v2456
        %v2458 = vpop.f32.mrb[0].mxu0
        %v2459 = vpop.f32.mrb[0].mxu0
        %v2460 = vadd.f32 0.0, %v2459
        %v2461 = vpop.f32.mrb[0].mxu0
        %2462 = vdwg.mxu0
        %2463 = vrot.lane.b32.xlu0 %v633, 32
        %v2464 = vpop.permute.xlu0 %2463
        %v2467 = vsel %vm824, %v2367, 0
        %2469 = vmatprep.subr.bf16.mxu0 0
        %2470 = vmatpush1.bf16.msra.mxu0 %v2464
        %2471 = vmatprep.subr.bf16.mxu0 0
        %2472 = vmatpush1.bf16.msra.mxu0 0
        %2473 = vmatprep.subr.bf16.mxu0 0
        %2474 = vmatpush1.bf16.msra.mxu0 0
        %2475 = vmatprep.subr.bf16.mxu0 0
        %2476 = vmatpush1.bf16.msra.mxu0 0
        %2477 = vmatprep.subr.bf16.mxu0 0
        %2478 = vmatpush1.bf16.msra.mxu0 0
        %2479 = vmatprep.subr.bf16.mxu0 0
        %2480 = vmatpush1.bf16.msra.mxu0 0
        %2481 = vmatprep.subr.bf16.mxu0 0
        %2482 = vmatpush1.bf16.msra.mxu0 0
        %2483 = vmatprep.subr.bf16.mxu0 0
        %2484 = vmatpush1.bf16.msra.mxu0 0
        %2485 = vmatprep.subr.bf16.mxu0 0
        %2486 = vmatpush1.bf16.msra.mxu0 0
        %2487 = vmatprep.subr.bf16.mxu0 0
        %2488 = vmatpush1.bf16.msra.mxu0 0
        %2489 = vmatprep.subr.bf16.mxu0 0
        %2490 = vmatpush1.bf16.msra.mxu0 0
        %2491 = vmatprep.subr.bf16.mxu0 0
        %2492 = vmatpush1.bf16.msra.mxu0 0
        %2493 = vmatprep.subr.bf16.mxu0 0
        %2494 = vmatpush1.bf16.msra.mxu0 0
        %2495 = vmatprep.subr.bf16.mxu0 0
        %2496 = vmatpush1.bf16.msra.mxu0 0
        %2497 = vmatprep.subr.bf16.mxu0 0
        %2498 = vmatpush1.bf16.msra.mxu0 0
        %2499 = vmatprep.subr.bf16.mxu0 0
        %2500 = vmatpush1.bf16.msra.mxu0 0
        %2501 = vmatprep.mubr.bf16.mxu0 0
        %2502 = vmatmul.mubr.bf16.gmra.mrb[0].mxu0 %v2467
        %v2503 = vpop.f32.mrb[0].mxu0
        %v2504 = vadd.f32 0.0, %v2503
        %v2505 = vpop.f32.mrb[0].mxu0
        %v2506 = vpop.f32.mrb[0].mxu0
        %v2507 = vadd.f32 0.0, %v2506
        %v2508 = vpop.f32.mrb[0].mxu0
        %2509 = vdwg.mxu0
        %2510 = vrot.lane.b32.xlu0 %v634, 32
        %v2511 = vpop.permute.xlu0 %2510
        %v2514 = vsel %vm824, %v2368, 0
        %2516 = vmatprep.subr.bf16.mxu0 0
        %2517 = vmatpush1.bf16.msra.mxu0 %v2511
        %2518 = vmatprep.subr.bf16.mxu0 0
        %2519 = vmatpush1.bf16.msra.mxu0 0
        %2520 = vmatprep.subr.bf16.mxu0 0
        %2521 = vmatpush1.bf16.msra.mxu0 0
        %2522 = vmatprep.subr.bf16.mxu0 0
        %2523 = vmatpush1.bf16.msra.mxu0 0
        %2524 = vmatprep.subr.bf16.mxu0 0
        %2525 = vmatpush1.bf16.msra.mxu0 0
        %2526 = vmatprep.subr.bf16.mxu0 0
        %2527 = vmatpush1.bf16.msra.mxu0 0
        %2528 = vmatprep.subr.bf16.mxu0 0
        %2529 = vmatpush1.bf16.msra.mxu0 0
        %2530 = vmatprep.subr.bf16.mxu0 0
        %2531 = vmatpush1.bf16.msra.mxu0 0
        %2532 = vmatprep.subr.bf16.mxu0 0
        %2533 = vmatpush1.bf16.msra.mxu0 0
        %2534 = vmatprep.subr.bf16.mxu0 0
        %2535 = vmatpush1.bf16.msra.mxu0 0
        %2536 = vmatprep.subr.bf16.mxu0 0
        %2537 = vmatpush1.bf16.msra.mxu0 0
        %2538 = vmatprep.subr.bf16.mxu0 0
        %2539 = vmatpush1.bf16.msra.mxu0 0
        %2540 = vmatprep.subr.bf16.mxu0 0
        %2541 = vmatpush1.bf16.msra.mxu0 0
        %2542 = vmatprep.subr.bf16.mxu0 0
        %2543 = vmatpush1.bf16.msra.mxu0 0
        %2544 = vmatprep.subr.bf16.mxu0 0
        %2545 = vmatpush1.bf16.msra.mxu0 0
        %2546 = vmatprep.subr.bf16.mxu0 0
        %2547 = vmatpush1.bf16.msra.mxu0 0
        %2548 = vmatprep.mubr.bf16.mxu0 0
        %2549 = vmatmul.mubr.bf16.gmra.mrb[0].mxu0 %v2514
        %v2550 = vpop.f32.mrb[0].mxu0
        %v2551 = vadd.f32 0.0, %v2550
        %v2552 = vpop.f32.mrb[0].mxu0
        %v2553 = vpop.f32.mrb[0].mxu0
        %v2554 = vadd.f32 0.0, %v2553
        %v2555 = vpop.f32.mrb[0].mxu0
        %2556 = vdwg.mxu0
        %2565 = vrot.lane.b32.xlu0 %v1439, 32
        %v2566 = vpop.permute.xlu0 %2565
        %2567 = vrot.lane.b32.xlu0 %v1442, 32
        %v2568 = vpop.permute.xlu0 %2567
        %2569 = vrot.lane.b32.xlu0 %v1487, 32
        %v2570 = vpop.permute.xlu0 %2569
        %2571 = vrot.lane.b32.xlu0 %v1490, 32
        %v2572 = vpop.permute.xlu0 %2571
        %2573 = vrot.lane.b32.xlu0 %v1535, 32
        %v2574 = vpop.permute.xlu0 %2573
        %2575 = vrot.lane.b32.xlu0 %v1538, 32
        %v2576 = vpop.permute.xlu0 %2575
        %2577 = vrot.lane.b32.xlu0 %v1583, 32
        %v2578 = vpop.permute.xlu0 %2577
        %2579 = vrot.lane.b32.xlu0 %v1586, 32
        %v2580 = vpop.permute.xlu0 %2579
        %2597 = vrot.lane.b32.xlu0 %v1926, 64
        %v2598 = vpop.permute.xlu0 %2597
        %2599 = vrot.lane.b32.xlu0 %v1929, 64
        %v2600 = vpop.permute.xlu0 %2599
        %2601 = vrot.lane.b32.xlu0 %v1973, 64
        %v2602 = vpop.permute.xlu0 %2601
        %2603 = vrot.lane.b32.xlu0 %v1976, 64
        %v2604 = vpop.permute.xlu0 %2603
        %2605 = vrot.lane.b32.xlu0 %v2020, 64
        %v2606 = vpop.permute.xlu0 %2605
        %2607 = vrot.lane.b32.xlu0 %v2023, 64
        %v2608 = vpop.permute.xlu0 %2607
        %2609 = vrot.lane.b32.xlu0 %v2067, 64
        %v2610 = vpop.permute.xlu0 %2609
        %2611 = vrot.lane.b32.xlu0 %v2070, 64
        %v2612 = vpop.permute.xlu0 %2611
        %2629 = vrot.lane.b32.xlu0 %v2410, 96
        %v2630 = vpop.permute.xlu0 %2629
        %2631 = vrot.lane.b32.xlu0 %v2413, 96
        %v2632 = vpop.permute.xlu0 %2631
        %2633 = vrot.lane.b32.xlu0 %v2457, 96
        %v2634 = vpop.permute.xlu0 %2633
        %2635 = vrot.lane.b32.xlu0 %v2460, 96
        %v2636 = vpop.permute.xlu0 %2635
        %2637 = vrot.lane.b32.xlu0 %v2504, 96
        %v2638 = vpop.permute.xlu0 %2637
        %2639 = vrot.lane.b32.xlu0 %v2507, 96
        %v2640 = vpop.permute.xlu0 %2639
        %2641 = vrot.lane.b32.xlu0 %v2551, 96
        %v2642 = vpop.permute.xlu0 %2641
        %2643 = vrot.lane.b32.xlu0 %v2554, 96
        %v2644 = vpop.permute.xlu0 %2643
        %v2653 = vsel %vm635, %v955, %v2566
        %v2654 = vsel %vm635, %v958, %v2568
        %v2655 = vsel %vm635, %v999, %v2570
        %v2656 = vsel %vm635, %v1002, %v2572
        %v2657 = vsel %vm635, %v1043, %v2574
        %v2658 = vsel %vm635, %v1046, %v2576
        %v2659 = vsel %vm635, %v1087, %v2578
        %v2660 = vsel %vm635, %v1090, %v2580
        %vm2661 = vcmask 523264
        %v2662 = vsel %vm2661, %v2653, %v2598
        %v2663 = vsel %vm2661, %v2654, %v2600
        %v2664 = vsel %vm2661, %v2655, %v2602
        %v2665 = vsel %vm2661, %v2656, %v2604
        %v2666 = vsel %vm2661, %v2657, %v2606
        %v2667 = vsel %vm2661, %v2658, %v2608
        %v2668 = vsel %vm2661, %v2659, %v2610
        %v2669 = vsel %vm2661, %v2660, %v2612
        %vm2670 = vcmask 785408
        %v2671 = vsel %vm2670, %v2662, %v2630
        %v2672 = vsel %vm2670, %v2663, %v2632
        %v2673 = vsel %vm2670, %v2664, %v2634
        %v2674 = vsel %vm2670, %v2665, %v2636
        %v2675 = vsel %vm2670, %v2666, %v2638
        %v2676 = vsel %vm2670, %v2667, %v2640
        %v2677 = vsel %vm2670, %v2668, %v2642
        %v2678 = vsel %vm2670, %v2669, %v2644
        %v2679 = vpack.c.bf16 %v2672, %v2671
        %v2680 = vpack.c.bf16 %v2674, %v2673
        %v2681 = vpack.c.bf16 %v2676, %v2675
        %v2682 = vpack.c.bf16 %v2678, %v2677
        %v2683 = vld [vmem:[#allocation7] sm:$0xf]
        %v2684 = vld [vmem:[#allocation7 + $0x4] sm:$0xf]
        %v2685 = vld [vmem:[#allocation7 + $0x8] sm:$0xf]
        %v2686 = vld [vmem:[#allocation7 + $0xc] sm:$0xf]
        %v2687 = vld [vmem:[#allocation7 + $0x10] sm:$0xf]
        %v2688 = vld [vmem:[#allocation7 + $0x14] sm:$0xf]
        %v2689 = vld [vmem:[#allocation7 + $0x18] sm:$0xf]
        %v2690 = vld [vmem:[#allocation7 + $0x1c] sm:$0xf]
        %v2691 = vld [vmem:[#allocation7 + $0x20] sm:$0xf]
        %v2692 = vld [vmem:[#allocation7 + $0x24] sm:$0xf]
        %v2693 = vld [vmem:[#allocation7 + $0x28] sm:$0xf]
        %v2694 = vld [vmem:[#allocation7 + $0x2c] sm:$0xf]
        %v2695 = vld [vmem:[#allocation7 + $0x30] sm:$0xf]
        %v2696 = vld [vmem:[#allocation7 + $0x34] sm:$0xf]
        %v2697 = vld [vmem:[#allocation7 + $0x38] sm:$0xf]
        %v2698 = vld [vmem:[#allocation7 + $0x3c] sm:$0xf]
        %v2699 = vld [vmem:[%s3] sm:$0x1]
        %v2701 = vlaneseq
        %v2702 = vshrl.u32 %v2701, 7
        %v2703 = vsub.s32 0, %v2702
        %v2704 = vrot.slane %v2699, %v2703
        %v2722 = vunpack.c.l.b16 %v2683
        %v2723 = vunpack.c.l.b16 %v2684
        %v2724 = vunpack.c.l.b16 %v2685
        %v2725 = vunpack.c.l.b16 %v2686
        %v2726 = vunpack.c.l.b16 %v2687
        %v2727 = vunpack.c.l.b16 %v2688
        %v2728 = vunpack.c.l.b16 %v2689
        %v2729 = vunpack.c.l.b16 %v2690
        %v2730 = vunpack.c.l.b16 %v2691
        %v2731 = vunpack.c.l.b16 %v2692
        %v2732 = vunpack.c.l.b16 %v2693
        %v2733 = vunpack.c.l.b16 %v2694
        %v2734 = vunpack.c.l.b16 %v2695
        %v2735 = vunpack.c.l.b16 %v2696
        %v2736 = vunpack.c.l.b16 %v2697
        %v2737 = vunpack.c.l.b16 %v2698
        %v2738 = vpack.c.b16 %v2723, %v2722
        %v2739 = vpack.c.b16 %v2725, %v2724
        %v2740 = vpack.c.b16 %v2727, %v2726
        %v2741 = vpack.c.b16 %v2729, %v2728
        %v2742 = vpack.c.b16 %v2731, %v2730
        %v2743 = vpack.c.b16 %v2733, %v2732
        %v2744 = vpack.c.b16 %v2735, %v2734
        %v2745 = vpack.c.b16 %v2737, %v2736
        %2754 = vmatprep.subr.bf16.mxu0 0
        %2755 = vmatpush1.bf16.msra.mxu0 %v2738
        %2756 = vmatprep.subr.bf16.mxu0 0
        %2757 = vmatpush1.bf16.msra.mxu0 %v2739
        %2758 = vmatprep.subr.bf16.mxu0 0
        %2759 = vmatpush1.bf16.msra.mxu0 %v2740
        %2760 = vmatprep.subr.bf16.mxu0 0
        %2761 = vmatpush1.bf16.msra.mxu0 %v2741
        %2762 = vmatprep.subr.bf16.mxu0 0
        %2763 = vmatpush1.bf16.msra.mxu0 %v2742
        %2764 = vmatprep.subr.bf16.mxu0 0
        %2765 = vmatpush1.bf16.msra.mxu0 %v2743
        %2766 = vmatprep.subr.bf16.mxu0 0
        %2767 = vmatpush1.bf16.msra.mxu0 %v2744
        %2768 = vmatprep.subr.bf16.mxu0 0
        %2769 = vmatpush1.bf16.msra.mxu0 %v2745
        %2770 = vmatprep.subr.bf16.mxu0 0
        %2771 = vmatpush1.bf16.msra.mxu0 0
        %2772 = vmatprep.subr.bf16.mxu0 0
        %2773 = vmatpush1.bf16.msra.mxu0 0
        %2774 = vmatprep.subr.bf16.mxu0 0
        %2775 = vmatpush1.bf16.msra.mxu0 0
        %2776 = vmatprep.subr.bf16.mxu0 0
        %2777 = vmatpush1.bf16.msra.mxu0 0
        %2778 = vmatprep.subr.bf16.mxu0 0
        %2779 = vmatpush1.bf16.msra.mxu0 0
        %2780 = vmatprep.subr.bf16.mxu0 0
        %2781 = vmatpush1.bf16.msra.mxu0 0
        %2782 = vmatprep.subr.bf16.mxu0 0
        %2783 = vmatpush1.bf16.msra.mxu0 0
        %2784 = vmatprep.subr.bf16.mxu0 0
        %2785 = vmatpush1.bf16.msra.mxu0 0
        %2786 = vmatprep.mubr.bf16.mxu0 0
        %2787 = vmatmul.mubr.bf16.gmra.mrb[0].mxu0 %v2679
        %v2788 = vpop.f32.mrb[0].mxu0
        %v2789 = vadd.f32 %v2704, %v2788
        %v2790 = vpop.f32.mrb[0].mxu0
        %v2791 = vpop.f32.mrb[0].mxu0
        %v2792 = vadd.f32 %v2704, %v2791
        %v2793 = vpop.f32.mrb[0].mxu0
        %2794 = vmatprep.mubr.bf16.mxu0 0
        %2795 = vmatmul.mubr.bf16.gmra.mrb[0].mxu0 %v2680
        %v2796 = vpop.f32.mrb[0].mxu0
        %v2797 = vadd.f32 %v2704, %v2796
        %v2798 = vpop.f32.mrb[0].mxu0
        %v2799 = vpop.f32.mrb[0].mxu0
        %v2800 = vadd.f32 %v2704, %v2799
        %v2801 = vpop.f32.mrb[0].mxu0
        %2802 = vmatprep.mubr.bf16.mxu0 0
        %2803 = vmatmul.mubr.bf16.gmra.mrb[0].mxu0 %v2681
        %v2804 = vpop.f32.mrb[0].mxu0
        %v2805 = vadd.f32 %v2704, %v2804
        %v2806 = vpop.f32.mrb[0].mxu0
        %v2807 = vpop.f32.mrb[0].mxu0
        %v2808 = vadd.f32 %v2704, %v2807
        %v2809 = vpop.f32.mrb[0].mxu0
        %2810 = vmatprep.mubr.bf16.mxu0 0
        %2811 = vmatmul.mubr.bf16.gmra.mrb[0].mxu0 %v2682
        %v2812 = vpop.f32.mrb[0].mxu0
        %v2813 = vadd.f32 %v2704, %v2812
        %v2814 = vpop.f32.mrb[0].mxu0
        %v2815 = vpop.f32.mrb[0].mxu0
        %v2816 = vadd.f32 %v2704, %v2815
        %v2817 = vpop.f32.mrb[0].mxu0
        %2818 = vdwg.mxu0
        %2819 = vst [vmem:[%s287] sm:$0xff] %v2789
        %2820 = vst [vmem:[%s287 + $0x8] sm:$0xff] %v2792
        %2821 = vst [vmem:[%s287 + $0x10] sm:$0xff] %v2797
        %2822 = vst [vmem:[%s287 + $0x18] sm:$0xff] %v2800
        %2823 = vst [vmem:[%s287 + $0x20] sm:$0xff] %v2805
        %2824 = vst [vmem:[%s287 + $0x28] sm:$0xff] %v2808
        %2825 = vst [vmem:[%s287 + $0x30] sm:$0xff] %v2813
        %2826 = vst [vmem:[%s287 + $0x38] sm:$0xff] %v2816
        %s2827 = sand.u32 %s142, 1
        %s2828 = scalar_lea.sflag [#allocation4], %s2827
        %s2829 = sand.u32 %s142, 1
        %s2830 = smul.addr %s2829, 64
        %s2831 = scalar_lea.vmem [#allocation10], %s2830
        // Predicated region
        $region57: #{tpu_custom_call.1} parent=39 // pred_check
          %p2832 = pneg %p152
        $region58: #{tpu_custom_call.1} parent=39 // pred_check_branch
          %2834 = sbr.rel (%p2832) target = $region60
        $region59: #{tpu_custom_call.1} parent=39 // pred_region
          %s2835 = smul.u32 4, %s24
          %s2837 = ssub.s32 1024, 1024
          %2838 = vsyncadd %s2828, %s2837
          %s2839 = smul.addr %s2835, 2
          %s2840 = smul.addr %s2839, 128
          %s2841 = scalar_lea.hbm %s5, %s2840
          %s2842 = sshll.u32 %s2831, 4
          %s2843 = int_to_ptr.vmem [resolvable:$true] %s2842
          %2848 = dma.vmem_to_hbm [thread:$0]  %s2843, 1024, %s2841, %s2828, 128, 128, 8
        $region60: #{tpu_custom_call.1} parent=39 // pred_fallthru
          _
      $region40: #{tpu_custom_call.1} parent=5 // pred_fallthru
        _
      %p2849 = scmp.le.s32.totalorder 2, %s19
      // Predicated region
      $region61: #{tpu_custom_call.1} parent=5 // pred_check
        %p2850 = pneg %p2849
      $region62: #{tpu_custom_call.1} parent=5 // pred_check_branch
        %2852 = sbr.rel (%p2850) target = $region64
      $region63: #{tpu_custom_call.1} parent=5 // pred_region
        %s2853 = ssub.s32 %s19, 2
        // Predicated region
        $region65: #{tpu_custom_call.1} parent=63 // pred_check
          %p2854 = pneg %p158
        $region66: #{tpu_custom_call.1} parent=63 // pred_check_branch
          %2856 = sbr.rel (%p2854) target = $region68
        $region67: #{tpu_custom_call.1} parent=63 // pred_region
          %s2857 = sand.u32 %s143, 1
          %s2858 = scalar_lea.sflag [#allocation4], %s2857
          %s2859 = sand.u32 %s143, 1
          %s2860 = smul.addr %s2859, 64
          %s2861 = scalar_lea.vmem [#allocation10], %s2860
          %2862 = dma.done %s2858, 1024
        $region68: #{tpu_custom_call.1} parent=63 // pred_fallthru
          _
      $region64: #{tpu_custom_call.1} parent=5 // pred_fallthru
        _
    $region6: #{tpu_custom_call.1} parent=1 // loop_footer
      %s23 = sadd.s32 1, %s19
    $region7: #{tpu_custom_call.1} parent=1 // loop_footer_branch
      %18 = sbr.rel target = $region3
    $region8: #{tpu_custom_call.1} parent=1 // loop_exit
      _
    %2863 = vsyncpa [#allocation3], 1
    %s2864 = scalar_lea.sflag [#allocation3], 1
    %2865 = vsyncpa %s2864, 1
    %2866 = vsyncpa [#allocation6], 1
    %2867 = vsyncpa [#allocation9], 1
    %2868 = vsyncpa [#allocation4], 1
    %s2869 = scalar_lea.sflag [#allocation4], 1
    %2870 = vsyncpa %s2869, 1

</llo_original>
